<compile_context>
chip_gen: v7x
topology: tpu7x:2x2x1
jax: 0.10.0
libtpu: 0.0.40
codegen_flags: <defaults>
</compile_context>

<pallas_src>
import numpy as np
import jax
import jax.numpy as jnp
from jax.experimental import pallas as pl
from jax.experimental.pallas import tpu as pltpu

# ---- Config (small shapes consistent with the module) ----
BATCH = 2
SEQ = 8
D_MODEL = 32
HEADS = 4
D_K = D_MODEL // HEADS
FF_HIDDEN = 1024          # hard-coded in the PyTorch module
LN_EPS = 1e-5             # nn.LayerNorm default eps


def encoder_layer_kernel(x_ref, g1_ref, b1_ref, g2_ref, b2_ref,
                         w1_ref, bb1_ref, w2_ref, bb2_ref, o_ref):
    x = x_ref[...].astype(jnp.float32)            # (Bc, S, D) — one batch chunk
    Bc, S, D = x.shape

    def layernorm(v, g, b):
        # g, b stay 2-D (1, D) and broadcast — no 1-D intermediates.
        mu = jnp.mean(v, axis=-1, keepdims=True)
        var = jnp.mean((v - mu) ** 2, axis=-1, keepdims=True)
        return (v - mu) * jax.lax.rsqrt(var + LN_EPS) * g + b

    # ---- x1 = norm1(x) ----
    x1 = layernorm(x, g1_ref[...], b1_ref[...])   # (Bc, S, D)

    # ---- multi-head self-attention (no learned projections, q = k = v = x1) ----
    # All heads folded into the leading batch dim: one pair of batched contractions
    # instead of HEADS separate einsum pairs.  Everything stays f32 here.
    scale = np.float32(1.0 / np.sqrt(D_K))
    qh = jnp.concatenate(
        [x1[:, :, h * D_K:(h + 1) * D_K] for h in range(HEADS)],
        axis=0)                                   # (H*Bc, S, d_k), head-major stacking
    s = jnp.einsum('bqd,bkd->bqk', qh, qh,
                   preferred_element_type=jnp.float32) * scale           # (H*Bc, S, S)
    s = s - jnp.max(s, axis=-1, keepdims=True)
    p = jnp.exp(s)
    p = p * pl.reciprocal(jnp.sum(p, axis=-1, keepdims=True), approx=False)
    o = jnp.einsum('bqk,bkd->bqd', p, qh,
                   preferred_element_type=jnp.float32)                   # (H*Bc, S, d_k)
    attn = jnp.concatenate(
        [o[h * Bc:(h + 1) * Bc] for h in range(HEADS)], axis=-1)         # (Bc, S, D)

    # TODO(synk): dropout (attention dropout, dropout_1/2, FF dropout) treated as identity.
    # ---- residual + norm2 ----
    xa = x + attn
    xb = layernorm(xa, g2_ref[...], b2_ref[...])  # (Bc, S, D)

    # ---- feed-forward: Linear(D, 1024) -> ReLU -> Linear(1024, D) ----
    # Batch folded into the matmul M dimension; bf16 operands, f32 MXU accumulation.
    xb2 = xb.reshape(Bc * S, D)                   # (M, D), M = Bc*S
    hdn = jnp.dot(xb2.astype(jnp.bfloat16), w1_ref[...],
                  preferred_element_type=jnp.float32) + bb1_ref[...]     # (M, 1024)
    hdn = jnp.maximum(hdn, 0.0)
    ff = jnp.dot(hdn.astype(jnp.bfloat16), w2_ref[...],
                 preferred_element_type=jnp.float32) + bb2_ref[...]      # (M, D)

    # ---- final residual, stored in the natural (Bc, S, D) layout (no lane relayout) ----
    out = xb + ff.reshape(Bc, S, D)
    o_ref[...] = out.astype(o_ref.dtype)


def encoder_layer(x, g1, b1, g2, b2, w1, bb1, w2, bb2, *, num_blocks=1):
    """num_blocks=1 is the right choice at these sizes on ALL generations (v5e/v6e/v7x):
    splitting duplicates the dominant FF-weight DMA per core.  Only raise it (with
    CORE_PARALLEL, on v7x) once B*S per core is >= ~128 rows."""
    B, S, D = x.shape
    assert B % num_blocks == 0
    Bc = B // num_blocks

    # FF weights are expected pre-cast to bf16 ONCE at parameter setup (cached outside
    # the call path).  Defensive cast below is a no-op when callers already pass bf16.
    if w1.dtype != jnp.bfloat16:
        w1 = w1.astype(jnp.bfloat16)
    if w2.dtype != jnp.bfloat16:
        w2 = w2.astype(jnp.bfloat16)

    # Advisory cost estimate (kernel is tiny / latency- and DMA-bound).
    flops = 4 * B * S * D * FF_HIDDEN + 4 * B * HEADS * S * S * D_K
    transcendentals = B * HEADS * S * S + B * HEADS * S + 2 * B * S
    bytes_accessed = (2 * B * S * D * 4                       # x in, out (f32)
                      + (D * FF_HIDDEN + FF_HIDDEN * D) * 2   # bf16 W1, W2
                      + (FF_HIDDEN + D) * 4                   # FF biases
                      + 4 * D * 4)                            # LN gammas/betas

    def param(shape):
        # Constant-index full block; resident in VMEM (trivially small here).
        # When the grid has >1 step, single-buffer it: it never changes across steps,
        # so double-buffering would only waste VMEM (first thing to break on v7x's
        # 64 MiB VMEM if FF_HIDDEN/D ever scale).
        kwargs = {}
        if num_blocks > 1:
            kwargs["pipeline_mode"] = pl.Buffered(1)
        return pl.BlockSpec(shape, lambda i, _s=shape: (0,) * len(_s), **kwargs)

    if num_blocks > 1:
        # Actually distribute the grid axis across TensorCores (v7x); plain "parallel"
        # does not change core assignment.
        dim_sem = (pltpu.CORE_PARALLEL,)
    else:
        dim_sem = ("arbitrary",)

    out = pl.pallas_call(
        encoder_layer_kernel,
        out_shape=jax.ShapeDtypeStruct((B, S, D), jnp.float32),
        grid_spec=pltpu.PrefetchScalarGridSpec(
            num_scalar_prefetch=0,
            grid=(num_blocks,),
            in_specs=[
                pl.BlockSpec((Bc, S, D), lambda i: (i, 0, 0)),     # x
                param((1, D)),                                     # norm1 weight
                param((1, D)),                                     # norm1 bias
                param((1, D)),                                     # norm2 weight
                param((1, D)),                                     # norm2 bias
                param((D, FF_HIDDEN)),                             # ff W1 (in, out), bf16
                param((1, FF_HIDDEN)),                             # ff b1
                param((FF_HIDDEN, D)),                             # ff W2 (in, out), bf16
                param((1, D)),                                     # ff b2
            ],
            out_specs=pl.BlockSpec((Bc, S, D), lambda i: (i, 0, 0)),
        ),
        compiler_params=pltpu.CompilerParams(dimension_semantics=dim_sem),
        cost_estimate=pl.CostEstimate(
            flops=flops,
            transcendentals=transcendentals,
            bytes_accessed=bytes_accessed),
    )(x, g1, b1, g2, b2, w1, bb1, w2, bb2)

    return out


def encoder_layer_ref(x, g1, b1, g2, b2, w1, bb1, w2, bb2):
    """Pure-JAX f32 reference of the same forward pass (dropout = identity)."""
    def ln(v, g, b):
        mu = jnp.mean(v, axis=-1, keepdims=True)
        var = jnp.mean((v - mu) ** 2, axis=-1, keepdims=True)
        return (v - mu) * jax.lax.rsqrt(var + LN_EPS) * g + b

    B, S, D = x.shape
    x1 = ln(x, g1[0], b1[0])
    q = x1.reshape(B, S, HEADS, D_K).transpose(0, 2, 1, 3)     # (B, H, S, dk)
    s = jnp.einsum("bhqd,bhkd->bhqk", q, q) / np.sqrt(D_K)
    p = jax.nn.softmax(s, axis=-1)
    o = jnp.einsum("bhqk,bhkd->bhqd", p, q)
    attn = o.transpose(0, 2, 1, 3).reshape(B, S, D)
    xa = x + attn
    xb = ln(xa, g2[0], b2[0])
    hdn = jax.nn.relu(xb @ w1 + bb1[0])
    ff = hdn @ w2 + bb2[0]
    return xb + ff


if __name__ == "__main__":
    key = jax.random.PRNGKey(0)
    kx, k1, k2, k3, k4 = jax.random.split(key, 5)

    x = jax.random.normal(kx, (BATCH, SEQ, D_MODEL), dtype=jnp.float32)

    # Deterministic parameter init (LayerNorm: weight=1, bias=0; Linear: small normals).
    g1 = jnp.ones((1, D_MODEL), jnp.float32)
    b1 = jnp.zeros((1, D_MODEL), jnp.float32)
    g2 = jnp.ones((1, D_MODEL), jnp.float32)
    b2 = jnp.zeros((1, D_MODEL), jnp.float32)
    w1 = 0.02 * jax.random.normal(k1, (D_MODEL, FF_HIDDEN), dtype=jnp.float32)
    bb1 = 0.01 * jax.random.normal(k2, (1, FF_HIDDEN), dtype=jnp.float32)
    w2 = 0.02 * jax.random.normal(k3, (FF_HIDDEN, D_MODEL), dtype=jnp.float32)
    bb2 = 0.01 * jax.random.normal(k4, (1, D_MODEL), dtype=jnp.float32)

    # Cache bf16 copies of the FF weights ONCE at parameter setup (not per call).
    w1_bf = jnp.asarray(w1, jnp.bfloat16)
    w2_bf = jnp.asarray(w2, jnp.bfloat16)

    out = encoder_layer(x, g1, b1, g2, b2, w1_bf, bb1, w2_bf, bb2)
    out = jax.block_until_ready(out)

    ref = encoder_layer_ref(x, g1, b1, g2, b2, w1, bb1, w2, bb2)
    # Attention path is exact f32 (exact softmax reciprocal); only the FF matmuls use
    # bf16 operands with f32 accumulation, so errors stay ~1e-3.
    np.testing.assert_allclose(np.asarray(out), np.asarray(ref), rtol=1e-2, atol=1e-2)

    print("KERNEL_OK")
</pallas_src>

<mosaic_0001>
module attributes {stable_mosaic.version = 11 : i64} {
  func.func @encoder_layer_kernel(%arg0: i32, %arg1: memref<2x8x32xf32, #tpu.memory_space<vmem>>, %arg2: memref<1x32xf32, #tpu.memory_space<vmem>>, %arg3: memref<1x32xf32, #tpu.memory_space<vmem>>, %arg4: memref<1x32xf32, #tpu.memory_space<vmem>>, %arg5: memref<1x32xf32, #tpu.memory_space<vmem>>, %arg6: memref<32x1024xbf16, #tpu.memory_space<vmem>>, %arg7: memref<1x1024xf32, #tpu.memory_space<vmem>>, %arg8: memref<1024x32xbf16, #tpu.memory_space<vmem>>, %arg9: memref<1x32xf32, #tpu.memory_space<vmem>>, %arg10: memref<2x8x32xf32, #tpu.memory_space<vmem>>) attributes {dimension_semantics = [#tpu.dimension_semantics<arbitrary>], iteration_bounds = array<i64: 1>, scalar_prefetch = 0 : i64, scratch_operands = 0 : i64, tpu.core_type = #tpu.core_type<tc>, window_params = [{transform_indices = @transform_0, window_bounds = array<i64: 2, 8, 32>}, {pipeline_mode = #tpu.pipeline_mode<synchronous>, transform_indices = @transform_1, window_bounds = array<i64: 1, 32>}, {pipeline_mode = #tpu.pipeline_mode<synchronous>, transform_indices = @transform_2, window_bounds = array<i64: 1, 32>}, {pipeline_mode = #tpu.pipeline_mode<synchronous>, transform_indices = @transform_3, window_bounds = array<i64: 1, 32>}, {pipeline_mode = #tpu.pipeline_mode<synchronous>, transform_indices = @transform_4, window_bounds = array<i64: 1, 32>}, {pipeline_mode = #tpu.pipeline_mode<synchronous>, transform_indices = @transform_5, window_bounds = array<i64: 32, 1024>}, {pipeline_mode = #tpu.pipeline_mode<synchronous>, transform_indices = @transform_6, window_bounds = array<i64: 1, 1024>}, {pipeline_mode = #tpu.pipeline_mode<synchronous>, transform_indices = @transform_7, window_bounds = array<i64: 1024, 32>}, {pipeline_mode = #tpu.pipeline_mode<synchronous>, transform_indices = @transform_8, window_bounds = array<i64: 1, 32>}, {transform_indices = @transform_9, window_bounds = array<i64: 2, 8, 32>}]} {
    %c0 = arith.constant 0 : index
    %c0_0 = arith.constant 0 : index
    %c0_1 = arith.constant 0 : index
    %0 = vector.load %arg1[%c0, %c0_0, %c0_1] : memref<2x8x32xf32, #tpu.memory_space<vmem>>, vector<2x8x32xf32>
    %c0_2 = arith.constant 0 : index
    %c0_3 = arith.constant 0 : index
    %1 = vector.load %arg2[%c0_2, %c0_3] : memref<1x32xf32, #tpu.memory_space<vmem>>, vector<1x32xf32>
    %c0_4 = arith.constant 0 : index
    %c0_5 = arith.constant 0 : index
    %2 = vector.load %arg3[%c0_4, %c0_5] : memref<1x32xf32, #tpu.memory_space<vmem>>, vector<1x32xf32>
    %cst = arith.constant dense<0.000000e+00> : vector<2x8xf32>
    %3 = vector.multi_reduction <add>, %0, %cst [2] : vector<2x8x32xf32> to vector<2x8xf32>
    %4 = vector.shape_cast %3 : vector<2x8xf32> to vector<2x8x1xf32>
    %cst_6 = arith.constant 3.200000e+01 : f32
    %5 = vector.broadcast %cst_6 : f32 to vector<2x8x1xf32>
    %6 = arith.divf %4, %5 : vector<2x8x1xf32>
    %7 = vector.broadcast %6 : vector<2x8x1xf32> to vector<2x8x32xf32>
    %8 = arith.subf %0, %7 : vector<2x8x32xf32>
    %9 = arith.mulf %8, %8 : vector<2x8x32xf32>
    %cst_7 = arith.constant dense<0.000000e+00> : vector<2x8xf32>
    %10 = vector.multi_reduction <add>, %9, %cst_7 [2] : vector<2x8x32xf32> to vector<2x8xf32>
    %11 = vector.shape_cast %10 : vector<2x8xf32> to vector<2x8x1xf32>
    %cst_8 = arith.constant 3.200000e+01 : f32
    %12 = vector.broadcast %cst_8 : f32 to vector<2x8x1xf32>
    %13 = arith.divf %11, %12 : vector<2x8x1xf32>
    %14 = vector.broadcast %6 : vector<2x8x1xf32> to vector<2x8x32xf32>
    %15 = arith.subf %0, %14 : vector<2x8x32xf32>
    %cst_9 = arith.constant 9.99999974E-6 : f32
    %16 = vector.broadcast %cst_9 : f32 to vector<2x8x1xf32>
    %17 = arith.addf %13, %16 : vector<2x8x1xf32>
    %18 = math.rsqrt %17 : vector<2x8x1xf32>
    %19 = vector.broadcast %18 : vector<2x8x1xf32> to vector<2x8x32xf32>
    %20 = arith.mulf %15, %19 : vector<2x8x32xf32>
    %21 = vector.shape_cast %1 : vector<1x32xf32> to vector<1x1x32xf32>
    %22 = vector.broadcast %21 : vector<1x1x32xf32> to vector<2x8x32xf32>
    %23 = arith.mulf %20, %22 : vector<2x8x32xf32>
    %24 = vector.shape_cast %2 : vector<1x32xf32> to vector<1x1x32xf32>
    %25 = vector.broadcast %24 : vector<1x1x32xf32> to vector<2x8x32xf32>
    %26 = arith.addf %23, %25 : vector<2x8x32xf32>
    %27 = vector.extract_strided_slice %26 {offsets = [0, 0, 0], sizes = [2, 8, 8], strides = [1, 1, 1]} : vector<2x8x32xf32> to vector<2x8x8xf32>
    %28 = vector.extract_strided_slice %26 {offsets = [0, 0, 8], sizes = [2, 8, 8], strides = [1, 1, 1]} : vector<2x8x32xf32> to vector<2x8x8xf32>
    %29 = vector.extract_strided_slice %26 {offsets = [0, 0, 16], sizes = [2, 8, 8], strides = [1, 1, 1]} : vector<2x8x32xf32> to vector<2x8x8xf32>
    %30 = vector.extract_strided_slice %26 {offsets = [0, 0, 24], sizes = [2, 8, 8], strides = [1, 1, 1]} : vector<2x8x32xf32> to vector<2x8x8xf32>
    %31 = tpu.concatenate %27, %28, %29, %30 in 0 : vector<2x8x8xf32>, vector<2x8x8xf32>, vector<2x8x8xf32>, vector<2x8x8xf32> -> vector<8x8x8xf32>
    "tpu.trace_start"() <{level = 10 : i32, message = "bqd,bkd->bqk"}> : () -> ()
    %cst_10 = arith.constant dense<0.000000e+00> : vector<8x8x8xf32>
    %32 = tpu.matmul %31, %31, %cst_10 {dimension_numbers = #tpu.dot_dimension_numbers<[2], [2], [1], [1], [0, 0, 0, 1, 1, 1], [0], [0]>} : vector<8x8x8xf32>, vector<8x8x8xf32>, vector<8x8x8xf32> -> vector<8x8x8xf32>
    "tpu.trace_stop"() : () -> ()
    %cst_11 = arith.constant 0.353553385 : f32
    %33 = vector.broadcast %cst_11 : f32 to vector<8x8x8xf32>
    %34 = arith.mulf %32, %33 : vector<8x8x8xf32>
    %cst_12 = arith.constant dense<0xFF800000> : vector<8x8xf32>
    %35 = vector.multi_reduction <maximumf>, %34, %cst_12 [2] : vector<8x8x8xf32> to vector<8x8xf32>
    %36 = vector.shape_cast %35 : vector<8x8xf32> to vector<8x8x1xf32>
    %37 = vector.broadcast %36 : vector<8x8x1xf32> to vector<8x8x8xf32>
    %38 = arith.subf %34, %37 : vector<8x8x8xf32>
    %39 = math.exp %38 : vector<8x8x8xf32>
    %cst_13 = arith.constant dense<0.000000e+00> : vector<8x8xf32>
    %40 = vector.multi_reduction <add>, %39, %cst_13 [2] : vector<8x8x8xf32> to vector<8x8xf32>
    %41 = vector.shape_cast %40 : vector<8x8xf32> to vector<8x8x1xf32>
    %42 = tpu.reciprocal %41 : vector<8x8x1xf32> -> vector<8x8x1xf32>
    %43 = vector.broadcast %42 : vector<8x8x1xf32> to vector<8x8x8xf32>
    %44 = arith.mulf %39, %43 : vector<8x8x8xf32>
    "tpu.trace_start"() <{level = 10 : i32, message = "bqk,bkd->bqd"}> : () -> ()
    %cst_14 = arith.constant dense<0.000000e+00> : vector<8x8x8xf32>
    %45 = tpu.matmul %44, %31, %cst_14 {dimension_numbers = #tpu.dot_dimension_numbers<[2], [1], [1], [2], [0, 0, 0, 1, 1, 2], [0], [0]>} : vector<8x8x8xf32>, vector<8x8x8xf32>, vector<8x8x8xf32> -> vector<8x8x8xf32>
    "tpu.trace_stop"() : () -> ()
    %46 = vector.extract_strided_slice %45 {offsets = [0, 0, 0], sizes = [2, 8, 8], strides = [1, 1, 1]} : vector<8x8x8xf32> to vector<2x8x8xf32>
    %47 = vector.extract_strided_slice %45 {offsets = [2, 0, 0], sizes = [2, 8, 8], strides = [1, 1, 1]} : vector<8x8x8xf32> to vector<2x8x8xf32>
    %48 = vector.extract_strided_slice %45 {offsets = [4, 0, 0], sizes = [2, 8, 8], strides = [1, 1, 1]} : vector<8x8x8xf32> to vector<2x8x8xf32>
    %49 = vector.extract_strided_slice %45 {offsets = [6, 0, 0], sizes = [2, 8, 8], strides = [1, 1, 1]} : vector<8x8x8xf32> to vector<2x8x8xf32>
    %50 = tpu.concatenate %46, %47, %48, %49 in 2 : vector<2x8x8xf32>, vector<2x8x8xf32>, vector<2x8x8xf32>, vector<2x8x8xf32> -> vector<2x8x32xf32>
    %51 = arith.addf %0, %50 : vector<2x8x32xf32>
    %c0_15 = arith.constant 0 : index
    %c0_16 = arith.constant 0 : index
    %52 = vector.load %arg4[%c0_15, %c0_16] : memref<1x32xf32, #tpu.memory_space<vmem>>, vector<1x32xf32>
    %c0_17 = arith.constant 0 : index
    %c0_18 = arith.constant 0 : index
    %53 = vector.load %arg5[%c0_17, %c0_18] : memref<1x32xf32, #tpu.memory_space<vmem>>, vector<1x32xf32>
    %cst_19 = arith.constant dense<0.000000e+00> : vector<2x8xf32>
    %54 = vector.multi_reduction <add>, %51, %cst_19 [2] : vector<2x8x32xf32> to vector<2x8xf32>
    %55 = vector.shape_cast %54 : vector<2x8xf32> to vector<2x8x1xf32>
    %cst_20 = arith.constant 3.200000e+01 : f32
    %56 = vector.broadcast %cst_20 : f32 to vector<2x8x1xf32>
    %57 = arith.divf %55, %56 : vector<2x8x1xf32>
    %58 = vector.broadcast %57 : vector<2x8x1xf32> to vector<2x8x32xf32>
    %59 = arith.subf %51, %58 : vector<2x8x32xf32>
    %60 = arith.mulf %59, %59 : vector<2x8x32xf32>
    %cst_21 = arith.constant dense<0.000000e+00> : vector<2x8xf32>
    %61 = vector.multi_reduction <add>, %60, %cst_21 [2] : vector<2x8x32xf32> to vector<2x8xf32>
    %62 = vector.shape_cast %61 : vector<2x8xf32> to vector<2x8x1xf32>
    %cst_22 = arith.constant 3.200000e+01 : f32
    %63 = vector.broadcast %cst_22 : f32 to vector<2x8x1xf32>
    %64 = arith.divf %62, %63 : vector<2x8x1xf32>
    %65 = vector.broadcast %57 : vector<2x8x1xf32> to vector<2x8x32xf32>
    %66 = arith.subf %51, %65 : vector<2x8x32xf32>
    %cst_23 = arith.constant 9.99999974E-6 : f32
    %67 = vector.broadcast %cst_23 : f32 to vector<2x8x1xf32>
    %68 = arith.addf %64, %67 : vector<2x8x1xf32>
    %69 = math.rsqrt %68 : vector<2x8x1xf32>
    %70 = vector.broadcast %69 : vector<2x8x1xf32> to vector<2x8x32xf32>
    %71 = arith.mulf %66, %70 : vector<2x8x32xf32>
    %72 = vector.shape_cast %52 : vector<1x32xf32> to vector<1x1x32xf32>
    %73 = vector.broadcast %72 : vector<1x1x32xf32> to vector<2x8x32xf32>
    %74 = arith.mulf %71, %73 : vector<2x8x32xf32>
    %75 = vector.shape_cast %53 : vector<1x32xf32> to vector<1x1x32xf32>
    %76 = vector.broadcast %75 : vector<1x1x32xf32> to vector<2x8x32xf32>
    %77 = arith.addf %74, %76 : vector<2x8x32xf32>
    %78 = vector.shape_cast %77 : vector<2x8x32xf32> to vector<16x32xf32>
    %79 = arith.truncf %78 : vector<16x32xf32> to vector<16x32xbf16>
    %c0_24 = arith.constant 0 : index
    %c0_25 = arith.constant 0 : index
    %80 = vector.load %arg6[%c0_24, %c0_25] : memref<32x1024xbf16, #tpu.memory_space<vmem>>, vector<32x1024xbf16>
    %cst_26 = arith.constant dense<0.000000e+00> : vector<16x1024xf32>
    %81 = tpu.matmul %79, %80, %cst_26 {dimension_numbers = #tpu.dot_dimension_numbers<[1], [0], [0], [1], [0, 0, 1, 1], [], []>} : vector<16x32xbf16>, vector<32x1024xbf16>, vector<16x1024xf32> -> vector<16x1024xf32>
    %c0_27 = arith.constant 0 : index
    %c0_28 = arith.constant 0 : index
    %82 = vector.load %arg7[%c0_27, %c0_28] : memref<1x1024xf32, #tpu.memory_space<vmem>>, vector<1x1024xf32>
    %83 = vector.broadcast %82 : vector<1x1024xf32> to vector<16x1024xf32>
    %84 = arith.addf %81, %83 : vector<16x1024xf32>
    %cst_29 = arith.constant 0.000000e+00 : f32
    %85 = vector.broadcast %cst_29 : f32 to vector<16x1024xf32>
    %86 = arith.maximumf %84, %85 : vector<16x1024xf32>
    %87 = arith.truncf %86 : vector<16x1024xf32> to vector<16x1024xbf16>
    %c0_30 = arith.constant 0 : index
    %c0_31 = arith.constant 0 : index
    %88 = vector.load %arg8[%c0_30, %c0_31] : memref<1024x32xbf16, #tpu.memory_space<vmem>>, vector<1024x32xbf16>
    %cst_32 = arith.constant dense<0.000000e+00> : vector<16x32xf32>
    %89 = tpu.matmul %87, %88, %cst_32 {dimension_numbers = #tpu.dot_dimension_numbers<[1], [0], [0], [1], [0, 0, 1, 1], [], []>} : vector<16x1024xbf16>, vector<1024x32xbf16>, vector<16x32xf32> -> vector<16x32xf32>
    %c0_33 = arith.constant 0 : index
    %c0_34 = arith.constant 0 : index
    %90 = vector.load %arg9[%c0_33, %c0_34] : memref<1x32xf32, #tpu.memory_space<vmem>>, vector<1x32xf32>
    %91 = vector.broadcast %90 : vector<1x32xf32> to vector<16x32xf32>
    %92 = arith.addf %89, %91 : vector<16x32xf32>
    %93 = vector.shape_cast %92 : vector<16x32xf32> to vector<2x8x32xf32>
    %94 = arith.addf %77, %93 : vector<2x8x32xf32>
    %c0_35 = arith.constant 0 : index
    %c0_36 = arith.constant 0 : index
    %c0_37 = arith.constant 0 : index
    %95 = vector.load %arg10[%c0_35, %c0_36, %c0_37] : memref<2x8x32xf32, #tpu.memory_space<vmem>>, vector<2x8x32xf32>
    tpu.vector_store %arg10[%c0_35, %c0_36, %c0_37], %94 {strides = array<i32>} : memref<2x8x32xf32, #tpu.memory_space<vmem>>, vector<2x8x32xf32>,
    return
  }
  func.func @transform_0(%arg0: i32) -> (i32, i32, i32) {
    %c0_i32 = arith.constant 0 : i32
    %c0_i32_0 = arith.constant 0 : i32
    %c0_i32_1 = arith.constant 0 : i32
    return %arg0, %c0_i32, %c0_i32_0 : i32, i32, i32
  }
  func.func @transform_1(%arg0: i32) -> (i32, i32) {
    %c0_i32 = arith.constant 0 : i32
    %c0_i32_0 = arith.constant 0 : i32
    %c0_i32_1 = arith.constant 0 : i32
    return %c0_i32, %c0_i32_0 : i32, i32
  }
  func.func @transform_2(%arg0: i32) -> (i32, i32) {
    %c0_i32 = arith.constant 0 : i32
    %c0_i32_0 = arith.constant 0 : i32
    %c0_i32_1 = arith.constant 0 : i32
    return %c0_i32, %c0_i32_0 : i32, i32
  }
  func.func @transform_3(%arg0: i32) -> (i32, i32) {
    %c0_i32 = arith.constant 0 : i32
    %c0_i32_0 = arith.constant 0 : i32
    %c0_i32_1 = arith.constant 0 : i32
    return %c0_i32, %c0_i32_0 : i32, i32
  }
  func.func @transform_4(%arg0: i32) -> (i32, i32) {
    %c0_i32 = arith.constant 0 : i32
    %c0_i32_0 = arith.constant 0 : i32
    %c0_i32_1 = arith.constant 0 : i32
    return %c0_i32, %c0_i32_0 : i32, i32
  }
  func.func @transform_5(%arg0: i32) -> (i32, i32) {
    %c0_i32 = arith.constant 0 : i32
    %c0_i32_0 = arith.constant 0 : i32
    %c0_i32_1 = arith.constant 0 : i32
    return %c0_i32, %c0_i32_0 : i32, i32
  }
  func.func @transform_6(%arg0: i32) -> (i32, i32) {
    %c0_i32 = arith.constant 0 : i32
    %c0_i32_0 = arith.constant 0 : i32
    %c0_i32_1 = arith.constant 0 : i32
    return %c0_i32, %c0_i32_0 : i32, i32
  }
  func.func @transform_7(%arg0: i32) -> (i32, i32) {
    %c0_i32 = arith.constant 0 : i32
    %c0_i32_0 = arith.constant 0 : i32
    %c0_i32_1 = arith.constant 0 : i32
    return %c0_i32, %c0_i32_0 : i32, i32
  }
  func.func @transform_8(%arg0: i32) -> (i32, i32) {
    %c0_i32 = arith.constant 0 : i32
    %c0_i32_0 = arith.constant 0 : i32
    %c0_i32_1 = arith.constant 0 : i32
    return %c0_i32, %c0_i32_0 : i32, i32
  }
  func.func @transform_9(%arg0: i32) -> (i32, i32, i32) {
    %c0_i32 = arith.constant 0 : i32
    %c0_i32_0 = arith.constant 0 : i32
    %c0_i32_1 = arith.constant 0 : i32
    return %arg0, %c0_i32, %c0_i32_0 : i32, i32, i32
  }
}

</mosaic_0001>

<llo_original>
// kernel: tpu_custom_call.1
$region0: #{tpu_custom_call.1}
  #allocation0 [shape = 'u32[]', space=smem, size = 0x4, offset = 0x4, fixed_abs, tag = 'smem constant byte address 0x4 - core index']
  #allocation1 [shape = 'u32[144,128]{1,0:T(1,128)}', space=vmem, size = 0x12000, scoped, tag = 'internal scratch']
  %s0 = inlined_call_operand.vmem [shape: f32[2,8,32], index: 0, kind: input, shape index: {}]
  %s1 = inlined_call_operand.vmem [shape: f32[1,32], index: 1, kind: input, shape index: {}]
  %s2 = inlined_call_operand.vmem [shape: f32[1,32], index: 2, kind: input, shape index: {}]
  %s3 = inlined_call_operand.vmem [shape: f32[1,32], index: 3, kind: input, shape index: {}]
  %s4 = inlined_call_operand.vmem [shape: f32[1,32], index: 4, kind: input, shape index: {}]
  %s5 = inlined_call_operand.vmem [shape: bf16[32,1024], index: 5, kind: input, shape index: {}]
  %s6 = inlined_call_operand.vmem [shape: f32[1,1024], index: 6, kind: input, shape index: {}]
  %s7 = inlined_call_operand.vmem [shape: bf16[1024,32], index: 7, kind: input, shape index: {}]
  %s8 = inlined_call_operand.vmem [shape: f32[1,32], index: 8, kind: input, shape index: {}]
  %s9 = inlined_call_operand.hbm [shape: f32[2,8,32], index: 9, kind: output, shape index: {}]
  %s10 = sld [smem:[#allocation0]]
  $region46: #{tpu_custom_call.1} parent=0
    _
  %s12 = ssub.s32 1, %s10
  %s13 = scalar_select 0, %s12, %s10
  $region1: #{tpu_custom_call.1} parent=0
    #allocation2 [shape = 'u8[8192]{0}', space=vmem, size = 0x2000, scoped, tag = 'output window, operand 0, single buffered']
    #allocation3 [shape = 's32[1]{0}', space=sflag, size = 0x4, scoped, tag = 'scoped memory for tpu_custom_call.1']
    %14 = vsyncpa [#allocation3], 0
    // Predicated region
    $region2: #{tpu_custom_call.1} parent=1 // pred_check
      _
    $region3: #{tpu_custom_call.1} parent=1 // pred_check_branch
      %16 = sbr.rel (0) target = $region5
    $region4: #{tpu_custom_call.1} parent=1 // pred_region
      _
    $region5: #{tpu_custom_call.1} parent=1 // pred_fallthru
      _
    // Predicated region
    $region6: #{tpu_custom_call.1} parent=1 // pred_check
      _
    $region7: #{tpu_custom_call.1} parent=1 // pred_check_branch
      %18 = sbr.rel (0) target = $region9
    $region8: #{tpu_custom_call.1} parent=1 // pred_region
      _
    $region9: #{tpu_custom_call.1} parent=1 // pred_fallthru
      _
    // Predicated region
    $region10: #{tpu_custom_call.1} parent=1 // pred_check
      _
    $region11: #{tpu_custom_call.1} parent=1 // pred_check_branch
      %20 = sbr.rel (0) target = $region13
    $region12: #{tpu_custom_call.1} parent=1 // pred_region
      _
    $region13: #{tpu_custom_call.1} parent=1 // pred_fallthru
      _
    // Predicated region
    $region14: #{tpu_custom_call.1} parent=1 // pred_check
      _
    $region15: #{tpu_custom_call.1} parent=1 // pred_check_branch
      %22 = sbr.rel (0) target = $region17
    $region16: #{tpu_custom_call.1} parent=1 // pred_region
      _
    $region17: #{tpu_custom_call.1} parent=1 // pred_fallthru
      _
    // Predicated region
    $region18: #{tpu_custom_call.1} parent=1 // pred_check
      _
    $region19: #{tpu_custom_call.1} parent=1 // pred_check_branch
      %24 = sbr.rel (0) target = $region21
    $region20: #{tpu_custom_call.1} parent=1 // pred_region
      _
    $region21: #{tpu_custom_call.1} parent=1 // pred_fallthru
      _
    // Predicated region
    $region22: #{tpu_custom_call.1} parent=1 // pred_check
      _
    $region23: #{tpu_custom_call.1} parent=1 // pred_check_branch
      %26 = sbr.rel (0) target = $region25
    $region24: #{tpu_custom_call.1} parent=1 // pred_region
      _
    $region25: #{tpu_custom_call.1} parent=1 // pred_fallthru
      _
    // Predicated region
    $region26: #{tpu_custom_call.1} parent=1 // pred_check
      _
    $region27: #{tpu_custom_call.1} parent=1 // pred_check_branch
      %28 = sbr.rel (0) target = $region29
    $region28: #{tpu_custom_call.1} parent=1 // pred_region
      _
    $region29: #{tpu_custom_call.1} parent=1 // pred_fallthru
      _
    // Predicated region
    $region30: #{tpu_custom_call.1} parent=1 // pred_check
      _
    $region31: #{tpu_custom_call.1} parent=1 // pred_check_branch
      %30 = sbr.rel (0) target = $region33
    $region32: #{tpu_custom_call.1} parent=1 // pred_region
      _
    $region33: #{tpu_custom_call.1} parent=1 // pred_fallthru
      _
    // Predicated region
    $region34: #{tpu_custom_call.1} parent=1 // pred_check
      _
    $region35: #{tpu_custom_call.1} parent=1 // pred_check_branch
      %32 = sbr.rel (0) target = $region37
    $region36: #{tpu_custom_call.1} parent=1 // pred_region
      _
    $region37: #{tpu_custom_call.1} parent=1 // pred_fallthru
      _
    %v34 = vld [vmem:[%s0] sm:$0xff]
    %v35 = vld [vmem:[%s0 + $0x8] sm:$0xff]
    %v36 = vld [vmem:[%s1] sm:$0x1]
    %v37 = vld [vmem:[%s2] sm:$0x1]
    %vm38 = vcmask 261120
    %v39 = vsel %vm38, %v34, 0.0
    %40 = vadd.xlane.f32.xlu0 %v39
    %v41 = vpop.xlane.xlu0 %40
    %v42 = vsel %vm38, %v35, 0.0
    %43 = vadd.xlane.f32.xlu0 %v42
    %v44 = vpop.xlane.xlu0 %43
    %v45 = vrcp.pop 32.0
    %v46 = vmul.f32 %v41, %v45
    %v47 = vmul.f32 %v44, %v45
    %v48 = vsub.f32 %v34, %v46
    %v49 = vsub.f32 %v35, %v47
    %v50 = vmul.f32 %v48, %v48
    %v51 = vmul.f32 %v49, %v49
    %v52 = vsel %vm38, %v50, 0.0
    %53 = vadd.xlane.f32.xlu0 %v52
    %v54 = vpop.xlane.xlu0 %53
    %v55 = vsel %vm38, %v51, 0.0
    %56 = vadd.xlane.f32.xlu0 %v55
    %v57 = vpop.xlane.xlu0 %56
    %v58 = vmul.f32 %v54, %v45
    %v59 = vmul.f32 %v57, %v45
    %v60 = vadd.f32 %v58, 1e-05
    %v61 = vadd.f32 %v59, 1e-05
    %v62 = vrsqrt.pop %v60
    %v63 = vrsqrt.pop %v61
    %v64 = vmul.f32 %v48, %v62
    %v65 = vmul.f32 %v49, %v63
    %v67 = vlaneseq
    %v68 = vshrl.u32 %v67, 7
    %v69 = vsub.s32 0, %v68
    %v70 = vrot.slane %v36, %v69
    %v72 = vmul.f32 %v64, %v70
    %v73 = vmul.f32 %v65, %v70
    %v75 = vlaneseq
    %v76 = vshrl.u32 %v75, 7
    %v77 = vsub.s32 0, %v76
    %v78 = vrot.slane %v37, %v77
    %v80 = vadd.f32 %v72, %v78
    %v81 = vadd.f32 %v73, %v78
    %84 = vrot.lane.b32.xlu0 %v80, 120
    %v85 = vpop.permute.xlu0 %84
    %86 = vrot.lane.b32.xlu0 %v81, 120
    %v87 = vpop.permute.xlu0 %86
    %90 = vrot.lane.b32.xlu0 %v80, 112
    %v91 = vpop.permute.xlu0 %90
    %92 = vrot.lane.b32.xlu0 %v81, 112
    %v93 = vpop.permute.xlu0 %92
    %96 = vrot.lane.b32.xlu0 %v80, 104
    %v97 = vpop.permute.xlu0 %96
    %98 = vrot.lane.b32.xlu0 %v81, 104
    %v99 = vpop.permute.xlu0 %98
    %vm102 = vcmask 64512
    %v103 = vsel %vm102, %v80, 0
    %105 = vmatprep.subr.mxu0 0.0
    %106 = vmatpush1.xpose.msra.mxu0 %v103
    %107 = vmatprep.subr.mxu0 0.0
    %108 = vmatpush1.xpose.msra.mxu0 0.0
    %109 = vmatprep.subr.mxu0 0.0
    %110 = vmatpush1.xpose.msra.mxu0 0.0
    %111 = vmatprep.subr.mxu0 0.0
    %112 = vmatpush1.xpose.msra.mxu0 0.0
    %113 = vmatprep.subr.mxu0 0.0
    %114 = vmatpush1.xpose.msra.mxu0 0.0
    %115 = vmatprep.subr.mxu0 0.0
    %116 = vmatpush1.xpose.msra.mxu0 0.0
    %117 = vmatprep.subr.mxu0 0.0
    %118 = vmatpush1.xpose.msra.mxu0 0.0
    %119 = vmatprep.subr.mxu0 0.0
    %120 = vmatpush1.xpose.msra.mxu0 0.0
    %121 = vmatprep.subr.mxu0 0.0
    %122 = vmatpush1.xpose.msra.mxu0 0.0
    %123 = vmatprep.subr.mxu0 0.0
    %124 = vmatpush1.xpose.msra.mxu0 0.0
    %125 = vmatprep.subr.mxu0 0.0
    %126 = vmatpush1.xpose.msra.mxu0 0.0
    %127 = vmatprep.subr.mxu0 0.0
    %128 = vmatpush1.xpose.msra.mxu0 0.0
    %129 = vmatprep.subr.mxu0 0.0
    %130 = vmatpush1.xpose.msra.mxu0 0.0
    %131 = vmatprep.subr.mxu0 0.0
    %132 = vmatpush1.xpose.msra.mxu0 0.0
    %133 = vmatprep.subr.mxu0 0.0
    %134 = vmatpush1.xpose.msra.mxu0 0.0
    %135 = vmatprep.subr.mxu0 0.0
    %136 = vmatpush1.xpose.msra.mxu0 0.0
    %137 = vmatprep.subr.mxu0 0.0
    %138 = vmatpush1.xpose.msra.mxu0 0.0
    %139 = vmatprep.subr.mxu0 0.0
    %140 = vmatpush1.xpose.msra.mxu0 0.0
    %141 = vmatprep.subr.mxu0 0.0
    %142 = vmatpush1.xpose.msra.mxu0 0.0
    %143 = vmatprep.subr.mxu0 0.0
    %144 = vmatpush1.xpose.msra.mxu0 0.0
    %145 = vmatprep.subr.mxu0 0.0
    %146 = vmatpush1.xpose.msra.mxu0 0.0
    %147 = vmatprep.subr.mxu0 0.0
    %148 = vmatpush1.xpose.msra.mxu0 0.0
    %149 = vmatprep.subr.mxu0 0.0
    %150 = vmatpush1.xpose.msra.mxu0 0.0
    %151 = vmatprep.subr.mxu0 0.0
    %152 = vmatpush1.xpose.msra.mxu0 0.0
    %153 = vmatprep.subr.mxu0 0.0
    %154 = vmatpush1.xpose.msra.mxu0 0.0
    %155 = vmatprep.subr.mxu0 0.0
    %156 = vmatpush1.xpose.msra.mxu0 0.0
    %157 = vmatprep.subr.mxu0 0.0
    %158 = vmatpush1.xpose.msra.mxu0 0.0
    %159 = vmatprep.subr.mxu0 0.0
    %160 = vmatpush1.xpose.msra.mxu0 0.0
    %161 = vmatprep.subr.mxu0 0.0
    %162 = vmatpush1.xpose.msra.mxu0 0.0
    %163 = vmatprep.subr.mxu0 0.0
    %164 = vmatpush1.xpose.msra.mxu0 0.0
    %165 = vmatprep.subr.mxu0 0.0
    %166 = vmatpush1.xpose.msra.mxu0 0.0
    %167 = vmatprep.subr.mxu0 0.0
    %168 = vmatpush1.xpose.msra.mxu0 0.0
    %169 = vmatprep.mubr.f32.mxu0 0.0
    %170 = vmatmul.mubr.f32.gmra.mrb[0].mxu0 %v103
    %v171 = vpop.f32.mrb[0].mxu0
    %v172 = vadd.f32 0.0, %v171
    %v173 = vpop.f32.mrb[0].mxu0
    %174 = vdwg.mxu0
    %v175 = vsel %vm102, %v81, 0
    %177 = vmatprep.subr.mxu0 0.0
    %178 = vmatpush1.xpose.msra.mxu0 %v175
    %179 = vmatprep.subr.mxu0 0.0
    %180 = vmatpush1.xpose.msra.mxu0 0.0
    %181 = vmatprep.subr.mxu0 0.0
    %182 = vmatpush1.xpose.msra.mxu0 0.0
    %183 = vmatprep.subr.mxu0 0.0
    %184 = vmatpush1.xpose.msra.mxu0 0.0
    %185 = vmatprep.subr.mxu0 0.0
    %186 = vmatpush1.xpose.msra.mxu0 0.0
    %187 = vmatprep.subr.mxu0 0.0
    %188 = vmatpush1.xpose.msra.mxu0 0.0
    %189 = vmatprep.subr.mxu0 0.0
    %190 = vmatpush1.xpose.msra.mxu0 0.0
    %191 = vmatprep.subr.mxu0 0.0
    %192 = vmatpush1.xpose.msra.mxu0 0.0
    %193 = vmatprep.subr.mxu0 0.0
    %194 = vmatpush1.xpose.msra.mxu0 0.0
    %195 = vmatprep.subr.mxu0 0.0
    %196 = vmatpush1.xpose.msra.mxu0 0.0
    %197 = vmatprep.subr.mxu0 0.0
    %198 = vmatpush1.xpose.msra.mxu0 0.0
    %199 = vmatprep.subr.mxu0 0.0
    %200 = vmatpush1.xpose.msra.mxu0 0.0
    %201 = vmatprep.subr.mxu0 0.0
    %202 = vmatpush1.xpose.msra.mxu0 0.0
    %203 = vmatprep.subr.mxu0 0.0
    %204 = vmatpush1.xpose.msra.mxu0 0.0
    %205 = vmatprep.subr.mxu0 0.0
    %206 = vmatpush1.xpose.msra.mxu0 0.0
    %207 = vmatprep.subr.mxu0 0.0
    %208 = vmatpush1.xpose.msra.mxu0 0.0
    %209 = vmatprep.subr.mxu0 0.0
    %210 = vmatpush1.xpose.msra.mxu0 0.0
    %211 = vmatprep.subr.mxu0 0.0
    %212 = vmatpush1.xpose.msra.mxu0 0.0
    %213 = vmatprep.subr.mxu0 0.0
    %214 = vmatpush1.xpose.msra.mxu0 0.0
    %215 = vmatprep.subr.mxu0 0.0
    %216 = vmatpush1.xpose.msra.mxu0 0.0
    %217 = vmatprep.subr.mxu0 0.0
    %218 = vmatpush1.xpose.msra.mxu0 0.0
    %219 = vmatprep.subr.mxu0 0.0
    %220 = vmatpush1.xpose.msra.mxu0 0.0
    %221 = vmatprep.subr.mxu0 0.0
    %222 = vmatpush1.xpose.msra.mxu0 0.0
    %223 = vmatprep.subr.mxu0 0.0
    %224 = vmatpush1.xpose.msra.mxu0 0.0
    %225 = vmatprep.subr.mxu0 0.0
    %226 = vmatpush1.xpose.msra.mxu0 0.0
    %227 = vmatprep.subr.mxu0 0.0
    %228 = vmatpush1.xpose.msra.mxu0 0.0
    %229 = vmatprep.subr.mxu0 0.0
    %230 = vmatpush1.xpose.msra.mxu0 0.0
    %231 = vmatprep.subr.mxu0 0.0
    %232 = vmatpush1.xpose.msra.mxu0 0.0
    %233 = vmatprep.subr.mxu0 0.0
    %234 = vmatpush1.xpose.msra.mxu0 0.0
    %235 = vmatprep.subr.mxu0 0.0
    %236 = vmatpush1.xpose.msra.mxu0 0.0
    %237 = vmatprep.subr.mxu0 0.0
    %238 = vmatpush1.xpose.msra.mxu0 0.0
    %239 = vmatprep.subr.mxu0 0.0
    %240 = vmatpush1.xpose.msra.mxu0 0.0
    %241 = vmatprep.mubr.f32.mxu0 0.0
    %242 = vmatmul.mubr.f32.gmra.mrb[0].mxu0 %v175
    %v243 = vpop.f32.mrb[0].mxu0
    %v244 = vadd.f32 0.0, %v243
    %v245 = vpop.f32.mrb[0].mxu0
    %246 = vdwg.mxu0
    %v247 = vsel %vm102, %v85, 0
    %249 = vmatprep.subr.mxu0 0.0
    %250 = vmatpush1.xpose.msra.mxu0 %v247
    %251 = vmatprep.subr.mxu0 0.0
    %252 = vmatpush1.xpose.msra.mxu0 0.0
    %253 = vmatprep.subr.mxu0 0.0
    %254 = vmatpush1.xpose.msra.mxu0 0.0
    %255 = vmatprep.subr.mxu0 0.0
    %256 = vmatpush1.xpose.msra.mxu0 0.0
    %257 = vmatprep.subr.mxu0 0.0
    %258 = vmatpush1.xpose.msra.mxu0 0.0
    %259 = vmatprep.subr.mxu0 0.0
    %260 = vmatpush1.xpose.msra.mxu0 0.0
    %261 = vmatprep.subr.mxu0 0.0
    %262 = vmatpush1.xpose.msra.mxu0 0.0
    %263 = vmatprep.subr.mxu0 0.0
    %264 = vmatpush1.xpose.msra.mxu0 0.0
    %265 = vmatprep.subr.mxu0 0.0
    %266 = vmatpush1.xpose.msra.mxu0 0.0
    %267 = vmatprep.subr.mxu0 0.0
    %268 = vmatpush1.xpose.msra.mxu0 0.0
    %269 = vmatprep.subr.mxu0 0.0
    %270 = vmatpush1.xpose.msra.mxu0 0.0
    %271 = vmatprep.subr.mxu0 0.0
    %272 = vmatpush1.xpose.msra.mxu0 0.0
    %273 = vmatprep.subr.mxu0 0.0
    %274 = vmatpush1.xpose.msra.mxu0 0.0
    %275 = vmatprep.subr.mxu0 0.0
    %276 = vmatpush1.xpose.msra.mxu0 0.0
    %277 = vmatprep.subr.mxu0 0.0
    %278 = vmatpush1.xpose.msra.mxu0 0.0
    %279 = vmatprep.subr.mxu0 0.0
    %280 = vmatpush1.xpose.msra.mxu0 0.0
    %281 = vmatprep.subr.mxu0 0.0
    %282 = vmatpush1.xpose.msra.mxu0 0.0
    %283 = vmatprep.subr.mxu0 0.0
    %284 = vmatpush1.xpose.msra.mxu0 0.0
    %285 = vmatprep.subr.mxu0 0.0
    %286 = vmatpush1.xpose.msra.mxu0 0.0
    %287 = vmatprep.subr.mxu0 0.0
    %288 = vmatpush1.xpose.msra.mxu0 0.0
    %289 = vmatprep.subr.mxu0 0.0
    %290 = vmatpush1.xpose.msra.mxu0 0.0
    %291 = vmatprep.subr.mxu0 0.0
    %292 = vmatpush1.xpose.msra.mxu0 0.0
    %293 = vmatprep.subr.mxu0 0.0
    %294 = vmatpush1.xpose.msra.mxu0 0.0
    %295 = vmatprep.subr.mxu0 0.0
    %296 = vmatpush1.xpose.msra.mxu0 0.0
    %297 = vmatprep.subr.mxu0 0.0
    %298 = vmatpush1.xpose.msra.mxu0 0.0
    %299 = vmatprep.subr.mxu0 0.0
    %300 = vmatpush1.xpose.msra.mxu0 0.0
    %301 = vmatprep.subr.mxu0 0.0
    %302 = vmatpush1.xpose.msra.mxu0 0.0
    %303 = vmatprep.subr.mxu0 0.0
    %304 = vmatpush1.xpose.msra.mxu0 0.0
    %305 = vmatprep.subr.mxu0 0.0
    %306 = vmatpush1.xpose.msra.mxu0 0.0
    %307 = vmatprep.subr.mxu0 0.0
    %308 = vmatpush1.xpose.msra.mxu0 0.0
    %309 = vmatprep.subr.mxu0 0.0
    %310 = vmatpush1.xpose.msra.mxu0 0.0
    %311 = vmatprep.subr.mxu0 0.0
    %312 = vmatpush1.xpose.msra.mxu0 0.0
    %313 = vmatprep.mubr.f32.mxu0 0.0
    %314 = vmatmul.mubr.f32.gmra.mrb[0].mxu0 %v247
    %v315 = vpop.f32.mrb[0].mxu0
    %v316 = vadd.f32 0.0, %v315
    %v317 = vpop.f32.mrb[0].mxu0
    %318 = vdwg.mxu0
    %v319 = vsel %vm102, %v87, 0
    %321 = vmatprep.subr.mxu0 0.0
    %322 = vmatpush1.xpose.msra.mxu0 %v319
    %323 = vmatprep.subr.mxu0 0.0
    %324 = vmatpush1.xpose.msra.mxu0 0.0
    %325 = vmatprep.subr.mxu0 0.0
    %326 = vmatpush1.xpose.msra.mxu0 0.0
    %327 = vmatprep.subr.mxu0 0.0
    %328 = vmatpush1.xpose.msra.mxu0 0.0
    %329 = vmatprep.subr.mxu0 0.0
    %330 = vmatpush1.xpose.msra.mxu0 0.0
    %331 = vmatprep.subr.mxu0 0.0
    %332 = vmatpush1.xpose.msra.mxu0 0.0
    %333 = vmatprep.subr.mxu0 0.0
    %334 = vmatpush1.xpose.msra.mxu0 0.0
    %335 = vmatprep.subr.mxu0 0.0
    %336 = vmatpush1.xpose.msra.mxu0 0.0
    %337 = vmatprep.subr.mxu0 0.0
    %338 = vmatpush1.xpose.msra.mxu0 0.0
    %339 = vmatprep.subr.mxu0 0.0
    %340 = vmatpush1.xpose.msra.mxu0 0.0
    %341 = vmatprep.subr.mxu0 0.0
    %342 = vmatpush1.xpose.msra.mxu0 0.0
    %343 = vmatprep.subr.mxu0 0.0
    %344 = vmatpush1.xpose.msra.mxu0 0.0
    %345 = vmatprep.subr.mxu0 0.0
    %346 = vmatpush1.xpose.msra.mxu0 0.0
    %347 = vmatprep.subr.mxu0 0.0
    %348 = vmatpush1.xpose.msra.mxu0 0.0
    %349 = vmatprep.subr.mxu0 0.0
    %350 = vmatpush1.xpose.msra.mxu0 0.0
    %351 = vmatprep.subr.mxu0 0.0
    %352 = vmatpush1.xpose.msra.mxu0 0.0
    %353 = vmatprep.subr.mxu0 0.0
    %354 = vmatpush1.xpose.msra.mxu0 0.0
    %355 = vmatprep.subr.mxu0 0.0
    %356 = vmatpush1.xpose.msra.mxu0 0.0
    %357 = vmatprep.subr.mxu0 0.0
    %358 = vmatpush1.xpose.msra.mxu0 0.0
    %359 = vmatprep.subr.mxu0 0.0
    %360 = vmatpush1.xpose.msra.mxu0 0.0
    %361 = vmatprep.subr.mxu0 0.0
    %362 = vmatpush1.xpose.msra.mxu0 0.0
    %363 = vmatprep.subr.mxu0 0.0
    %364 = vmatpush1.xpose.msra.mxu0 0.0
    %365 = vmatprep.subr.mxu0 0.0
    %366 = vmatpush1.xpose.msra.mxu0 0.0
    %367 = vmatprep.subr.mxu0 0.0
    %368 = vmatpush1.xpose.msra.mxu0 0.0
    %369 = vmatprep.subr.mxu0 0.0
    %370 = vmatpush1.xpose.msra.mxu0 0.0
    %371 = vmatprep.subr.mxu0 0.0
    %372 = vmatpush1.xpose.msra.mxu0 0.0
    %373 = vmatprep.subr.mxu0 0.0
    %374 = vmatpush1.xpose.msra.mxu0 0.0
    %375 = vmatprep.subr.mxu0 0.0
    %376 = vmatpush1.xpose.msra.mxu0 0.0
    %377 = vmatprep.subr.mxu0 0.0
    %378 = vmatpush1.xpose.msra.mxu0 0.0
    %379 = vmatprep.subr.mxu0 0.0
    %380 = vmatpush1.xpose.msra.mxu0 0.0
    %381 = vmatprep.subr.mxu0 0.0
    %382 = vmatpush1.xpose.msra.mxu0 0.0
    %383 = vmatprep.subr.mxu0 0.0
    %384 = vmatpush1.xpose.msra.mxu0 0.0
    %385 = vmatprep.mubr.f32.mxu0 0.0
    %386 = vmatmul.mubr.f32.gmra.mrb[0].mxu0 %v319
    %v387 = vpop.f32.mrb[0].mxu0
    %v388 = vadd.f32 0.0, %v387
    %v389 = vpop.f32.mrb[0].mxu0
    %390 = vdwg.mxu0
    %v391 = vsel %vm102, %v91, 0
    %393 = vmatprep.subr.mxu0 0.0
    %394 = vmatpush1.xpose.msra.mxu0 %v391
    %395 = vmatprep.subr.mxu0 0.0
    %396 = vmatpush1.xpose.msra.mxu0 0.0
    %397 = vmatprep.subr.mxu0 0.0
    %398 = vmatpush1.xpose.msra.mxu0 0.0
    %399 = vmatprep.subr.mxu0 0.0
    %400 = vmatpush1.xpose.msra.mxu0 0.0
    %401 = vmatprep.subr.mxu0 0.0
    %402 = vmatpush1.xpose.msra.mxu0 0.0
    %403 = vmatprep.subr.mxu0 0.0
    %404 = vmatpush1.xpose.msra.mxu0 0.0
    %405 = vmatprep.subr.mxu0 0.0
    %406 = vmatpush1.xpose.msra.mxu0 0.0
    %407 = vmatprep.subr.mxu0 0.0
    %408 = vmatpush1.xpose.msra.mxu0 0.0
    %409 = vmatprep.subr.mxu0 0.0
    %410 = vmatpush1.xpose.msra.mxu0 0.0
    %411 = vmatprep.subr.mxu0 0.0
    %412 = vmatpush1.xpose.msra.mxu0 0.0
    %413 = vmatprep.subr.mxu0 0.0
    %414 = vmatpush1.xpose.msra.mxu0 0.0
    %415 = vmatprep.subr.mxu0 0.0
    %416 = vmatpush1.xpose.msra.mxu0 0.0
    %417 = vmatprep.subr.mxu0 0.0
    %418 = vmatpush1.xpose.msra.mxu0 0.0
    %419 = vmatprep.subr.mxu0 0.0
    %420 = vmatpush1.xpose.msra.mxu0 0.0
    %421 = vmatprep.subr.mxu0 0.0
    %422 = vmatpush1.xpose.msra.mxu0 0.0
    %423 = vmatprep.subr.mxu0 0.0
    %424 = vmatpush1.xpose.msra.mxu0 0.0
    %425 = vmatprep.subr.mxu0 0.0
    %426 = vmatpush1.xpose.msra.mxu0 0.0
    %427 = vmatprep.subr.mxu0 0.0
    %428 = vmatpush1.xpose.msra.mxu0 0.0
    %429 = vmatprep.subr.mxu0 0.0
    %430 = vmatpush1.xpose.msra.mxu0 0.0
    %431 = vmatprep.subr.mxu0 0.0
    %432 = vmatpush1.xpose.msra.mxu0 0.0
    %433 = vmatprep.subr.mxu0 0.0
    %434 = vmatpush1.xpose.msra.mxu0 0.0
    %435 = vmatprep.subr.mxu0 0.0
    %436 = vmatpush1.xpose.msra.mxu0 0.0
    %437 = vmatprep.subr.mxu0 0.0
    %438 = vmatpush1.xpose.msra.mxu0 0.0
    %439 = vmatprep.subr.mxu0 0.0
    %440 = vmatpush1.xpose.msra.mxu0 0.0
    %441 = vmatprep.subr.mxu0 0.0
    %442 = vmatpush1.xpose.msra.mxu0 0.0
    %443 = vmatprep.subr.mxu0 0.0
    %444 = vmatpush1.xpose.msra.mxu0 0.0
    %445 = vmatprep.subr.mxu0 0.0
    %446 = vmatpush1.xpose.msra.mxu0 0.0
    %447 = vmatprep.subr.mxu0 0.0
    %448 = vmatpush1.xpose.msra.mxu0 0.0
    %449 = vmatprep.subr.mxu0 0.0
    %450 = vmatpush1.xpose.msra.mxu0 0.0
    %451 = vmatprep.subr.mxu0 0.0
    %452 = vmatpush1.xpose.msra.mxu0 0.0
    %453 = vmatprep.subr.mxu0 0.0
    %454 = vmatpush1.xpose.msra.mxu0 0.0
    %455 = vmatprep.subr.mxu0 0.0
    %456 = vmatpush1.xpose.msra.mxu0 0.0
    %457 = vmatprep.mubr.f32.mxu0 0.0
    %458 = vmatmul.mubr.f32.gmra.mrb[0].mxu0 %v391
    %v459 = vpop.f32.mrb[0].mxu0
    %v460 = vadd.f32 0.0, %v459
    %v461 = vpop.f32.mrb[0].mxu0
    %462 = vdwg.mxu0
    %v463 = vsel %vm102, %v93, 0
    %465 = vmatprep.subr.mxu0 0.0
    %466 = vmatpush1.xpose.msra.mxu0 %v463
    %467 = vmatprep.subr.mxu0 0.0
    %468 = vmatpush1.xpose.msra.mxu0 0.0
    %469 = vmatprep.subr.mxu0 0.0
    %470 = vmatpush1.xpose.msra.mxu0 0.0
    %471 = vmatprep.subr.mxu0 0.0
    %472 = vmatpush1.xpose.msra.mxu0 0.0
    %473 = vmatprep.subr.mxu0 0.0
    %474 = vmatpush1.xpose.msra.mxu0 0.0
    %475 = vmatprep.subr.mxu0 0.0
    %476 = vmatpush1.xpose.msra.mxu0 0.0
    %477 = vmatprep.subr.mxu0 0.0
    %478 = vmatpush1.xpose.msra.mxu0 0.0
    %479 = vmatprep.subr.mxu0 0.0
    %480 = vmatpush1.xpose.msra.mxu0 0.0
    %481 = vmatprep.subr.mxu0 0.0
    %482 = vmatpush1.xpose.msra.mxu0 0.0
    %483 = vmatprep.subr.mxu0 0.0
    %484 = vmatpush1.xpose.msra.mxu0 0.0
    %485 = vmatprep.subr.mxu0 0.0
    %486 = vmatpush1.xpose.msra.mxu0 0.0
    %487 = vmatprep.subr.mxu0 0.0
    %488 = vmatpush1.xpose.msra.mxu0 0.0
    %489 = vmatprep.subr.mxu0 0.0
    %490 = vmatpush1.xpose.msra.mxu0 0.0
    %491 = vmatprep.subr.mxu0 0.0
    %492 = vmatpush1.xpose.msra.mxu0 0.0
    %493 = vmatprep.subr.mxu0 0.0
    %494 = vmatpush1.xpose.msra.mxu0 0.0
    %495 = vmatprep.subr.mxu0 0.0
    %496 = vmatpush1.xpose.msra.mxu0 0.0
    %497 = vmatprep.subr.mxu0 0.0
    %498 = vmatpush1.xpose.msra.mxu0 0.0
    %499 = vmatprep.subr.mxu0 0.0
    %500 = vmatpush1.xpose.msra.mxu0 0.0
    %501 = vmatprep.subr.mxu0 0.0
    %502 = vmatpush1.xpose.msra.mxu0 0.0
    %503 = vmatprep.subr.mxu0 0.0
    %504 = vmatpush1.xpose.msra.mxu0 0.0
    %505 = vmatprep.subr.mxu0 0.0
    %506 = vmatpush1.xpose.msra.mxu0 0.0
    %507 = vmatprep.subr.mxu0 0.0
    %508 = vmatpush1.xpose.msra.mxu0 0.0
    %509 = vmatprep.subr.mxu0 0.0
    %510 = vmatpush1.xpose.msra.mxu0 0.0
    %511 = vmatprep.subr.mxu0 0.0
    %512 = vmatpush1.xpose.msra.mxu0 0.0
    %513 = vmatprep.subr.mxu0 0.0
    %514 = vmatpush1.xpose.msra.mxu0 0.0
    %515 = vmatprep.subr.mxu0 0.0
    %516 = vmatpush1.xpose.msra.mxu0 0.0
    %517 = vmatprep.subr.mxu0 0.0
    %518 = vmatpush1.xpose.msra.mxu0 0.0
    %519 = vmatprep.subr.mxu0 0.0
    %520 = vmatpush1.xpose.msra.mxu0 0.0
    %521 = vmatprep.subr.mxu0 0.0
    %522 = vmatpush1.xpose.msra.mxu0 0.0
    %523 = vmatprep.subr.mxu0 0.0
    %524 = vmatpush1.xpose.msra.mxu0 0.0
    %525 = vmatprep.subr.mxu0 0.0
    %526 = vmatpush1.xpose.msra.mxu0 0.0
    %527 = vmatprep.subr.mxu0 0.0
    %528 = vmatpush1.xpose.msra.mxu0 0.0
    %529 = vmatprep.mubr.f32.mxu0 0.0
    %530 = vmatmul.mubr.f32.gmra.mrb[0].mxu0 %v463
    %v531 = vpop.f32.mrb[0].mxu0
    %v532 = vadd.f32 0.0, %v531
    %v533 = vpop.f32.mrb[0].mxu0
    %534 = vdwg.mxu0
    %v535 = vsel %vm102, %v97, 0
    %537 = vmatprep.subr.mxu0 0.0
    %538 = vmatpush1.xpose.msra.mxu0 %v535
    %539 = vmatprep.subr.mxu0 0.0
    %540 = vmatpush1.xpose.msra.mxu0 0.0
    %541 = vmatprep.subr.mxu0 0.0
    %542 = vmatpush1.xpose.msra.mxu0 0.0
    %543 = vmatprep.subr.mxu0 0.0
    %544 = vmatpush1.xpose.msra.mxu0 0.0
    %545 = vmatprep.subr.mxu0 0.0
    %546 = vmatpush1.xpose.msra.mxu0 0.0
    %547 = vmatprep.subr.mxu0 0.0
    %548 = vmatpush1.xpose.msra.mxu0 0.0
    %549 = vmatprep.subr.mxu0 0.0
    %550 = vmatpush1.xpose.msra.mxu0 0.0
    %551 = vmatprep.subr.mxu0 0.0
    %552 = vmatpush1.xpose.msra.mxu0 0.0
    %553 = vmatprep.subr.mxu0 0.0
    %554 = vmatpush1.xpose.msra.mxu0 0.0
    %555 = vmatprep.subr.mxu0 0.0
    %556 = vmatpush1.xpose.msra.mxu0 0.0
    %557 = vmatprep.subr.mxu0 0.0
    %558 = vmatpush1.xpose.msra.mxu0 0.0
    %559 = vmatprep.subr.mxu0 0.0
    %560 = vmatpush1.xpose.msra.mxu0 0.0
    %561 = vmatprep.subr.mxu0 0.0
    %562 = vmatpush1.xpose.msra.mxu0 0.0
    %563 = vmatprep.subr.mxu0 0.0
    %564 = vmatpush1.xpose.msra.mxu0 0.0
    %565 = vmatprep.subr.mxu0 0.0
    %566 = vmatpush1.xpose.msra.mxu0 0.0
    %567 = vmatprep.subr.mxu0 0.0
    %568 = vmatpush1.xpose.msra.mxu0 0.0
    %569 = vmatprep.subr.mxu0 0.0
    %570 = vmatpush1.xpose.msra.mxu0 0.0
    %571 = vmatprep.subr.mxu0 0.0
    %572 = vmatpush1.xpose.msra.mxu0 0.0
    %573 = vmatprep.subr.mxu0 0.0
    %574 = vmatpush1.xpose.msra.mxu0 0.0
    %575 = vmatprep.subr.mxu0 0.0
    %576 = vmatpush1.xpose.msra.mxu0 0.0
    %577 = vmatprep.subr.mxu0 0.0
    %578 = vmatpush1.xpose.msra.mxu0 0.0
    %579 = vmatprep.subr.mxu0 0.0
    %580 = vmatpush1.xpose.msra.mxu0 0.0
    %581 = vmatprep.subr.mxu0 0.0
    %582 = vmatpush1.xpose.msra.mxu0 0.0
    %583 = vmatprep.subr.mxu0 0.0
    %584 = vmatpush1.xpose.msra.mxu0 0.0
    %585 = vmatprep.subr.mxu0 0.0
    %586 = vmatpush1.xpose.msra.mxu0 0.0
    %587 = vmatprep.subr.mxu0 0.0
    %588 = vmatpush1.xpose.msra.mxu0 0.0
    %589 = vmatprep.subr.mxu0 0.0
    %590 = vmatpush1.xpose.msra.mxu0 0.0
    %591 = vmatprep.subr.mxu0 0.0
    %592 = vmatpush1.xpose.msra.mxu0 0.0
    %593 = vmatprep.subr.mxu0 0.0
    %594 = vmatpush1.xpose.msra.mxu0 0.0
    %595 = vmatprep.subr.mxu0 0.0
    %596 = vmatpush1.xpose.msra.mxu0 0.0
    %597 = vmatprep.subr.mxu0 0.0
    %598 = vmatpush1.xpose.msra.mxu0 0.0
    %599 = vmatprep.subr.mxu0 0.0
    %600 = vmatpush1.xpose.msra.mxu0 0.0
    %601 = vmatprep.mubr.f32.mxu0 0.0
    %602 = vmatmul.mubr.f32.gmra.mrb[0].mxu0 %v535
    %v603 = vpop.f32.mrb[0].mxu0
    %v604 = vadd.f32 0.0, %v603
    %v605 = vpop.f32.mrb[0].mxu0
    %606 = vdwg.mxu0
    %v607 = vsel %vm102, %v99, 0
    %609 = vmatprep.subr.mxu0 0.0
    %610 = vmatpush1.xpose.msra.mxu0 %v607
    %611 = vmatprep.subr.mxu0 0.0
    %612 = vmatpush1.xpose.msra.mxu0 0.0
    %613 = vmatprep.subr.mxu0 0.0
    %614 = vmatpush1.xpose.msra.mxu0 0.0
    %615 = vmatprep.subr.mxu0 0.0
    %616 = vmatpush1.xpose.msra.mxu0 0.0
    %617 = vmatprep.subr.mxu0 0.0
    %618 = vmatpush1.xpose.msra.mxu0 0.0
    %619 = vmatprep.subr.mxu0 0.0
    %620 = vmatpush1.xpose.msra.mxu0 0.0
    %621 = vmatprep.subr.mxu0 0.0
    %622 = vmatpush1.xpose.msra.mxu0 0.0
    %623 = vmatprep.subr.mxu0 0.0
    %624 = vmatpush1.xpose.msra.mxu0 0.0
    %625 = vmatprep.subr.mxu0 0.0
    %626 = vmatpush1.xpose.msra.mxu0 0.0
    %627 = vmatprep.subr.mxu0 0.0
    %628 = vmatpush1.xpose.msra.mxu0 0.0
    %629 = vmatprep.subr.mxu0 0.0
    %630 = vmatpush1.xpose.msra.mxu0 0.0
    %631 = vmatprep.subr.mxu0 0.0
    %632 = vmatpush1.xpose.msra.mxu0 0.0
    %633 = vmatprep.subr.mxu0 0.0
    %634 = vmatpush1.xpose.msra.mxu0 0.0
    %635 = vmatprep.subr.mxu0 0.0
    %636 = vmatpush1.xpose.msra.mxu0 0.0
    %637 = vmatprep.subr.mxu0 0.0
    %638 = vmatpush1.xpose.msra.mxu0 0.0
    %639 = vmatprep.subr.mxu0 0.0
    %640 = vmatpush1.xpose.msra.mxu0 0.0
    %641 = vmatprep.subr.mxu0 0.0
    %642 = vmatpush1.xpose.msra.mxu0 0.0
    %643 = vmatprep.subr.mxu0 0.0
    %644 = vmatpush1.xpose.msra.mxu0 0.0
    %645 = vmatprep.subr.mxu0 0.0
    %646 = vmatpush1.xpose.msra.mxu0 0.0
    %647 = vmatprep.subr.mxu0 0.0
    %648 = vmatpush1.xpose.msra.mxu0 0.0
    %649 = vmatprep.subr.mxu0 0.0
    %650 = vmatpush1.xpose.msra.mxu0 0.0
    %651 = vmatprep.subr.mxu0 0.0
    %652 = vmatpush1.xpose.msra.mxu0 0.0
    %653 = vmatprep.subr.mxu0 0.0
    %654 = vmatpush1.xpose.msra.mxu0 0.0
    %655 = vmatprep.subr.mxu0 0.0
    %656 = vmatpush1.xpose.msra.mxu0 0.0
    %657 = vmatprep.subr.mxu0 0.0
    %658 = vmatpush1.xpose.msra.mxu0 0.0
    %659 = vmatprep.subr.mxu0 0.0
    %660 = vmatpush1.xpose.msra.mxu0 0.0
    %661 = vmatprep.subr.mxu0 0.0
    %662 = vmatpush1.xpose.msra.mxu0 0.0
    %663 = vmatprep.subr.mxu0 0.0
    %664 = vmatpush1.xpose.msra.mxu0 0.0
    %665 = vmatprep.subr.mxu0 0.0
    %666 = vmatpush1.xpose.msra.mxu0 0.0
    %667 = vmatprep.subr.mxu0 0.0
    %668 = vmatpush1.xpose.msra.mxu0 0.0
    %669 = vmatprep.subr.mxu0 0.0
    %670 = vmatpush1.xpose.msra.mxu0 0.0
    %671 = vmatprep.subr.mxu0 0.0
    %672 = vmatpush1.xpose.msra.mxu0 0.0
    %673 = vmatprep.mubr.f32.mxu0 0.0
    %674 = vmatmul.mubr.f32.gmra.mrb[0].mxu0 %v607
    %v675 = vpop.f32.mrb[0].mxu0
    %v676 = vadd.f32 0.0, %v675
    %v677 = vpop.f32.mrb[0].mxu0
    %678 = vdwg.mxu0
    %v679 = vmul.f32 %v172, 0.35355338
    %v680 = vmul.f32 %v244, 0.35355338
    %v681 = vmul.f32 %v316, 0.35355338
    %v682 = vmul.f32 %v388, 0.35355338
    %v683 = vmul.f32 %v460, 0.35355338
    %v684 = vmul.f32 %v532, 0.35355338
    %v685 = vmul.f32 %v604, 0.35355338
    %v686 = vmul.f32 %v676, 0.35355338
    %v687 = vsel %vm102, %v679, -inf
    %688 = vmax.xlane.f32.xlu0 %v687
    %v689 = vpop.xlane.xlu0 %688
    %v690 = vsel %vm102, %v680, -inf
    %691 = vmax.xlane.f32.xlu0 %v690
    %v692 = vpop.xlane.xlu0 %691
    %v693 = vsel %vm102, %v681, -inf
    %694 = vmax.xlane.f32.xlu0 %v693
    %v695 = vpop.xlane.xlu0 %694
    %v696 = vsel %vm102, %v682, -inf
    %697 = vmax.xlane.f32.xlu0 %v696
    %v698 = vpop.xlane.xlu0 %697
    %v699 = vsel %vm102, %v683, -inf
    %700 = vmax.xlane.f32.xlu0 %v699
    %v701 = vpop.xlane.xlu0 %700
    %v702 = vsel %vm102, %v684, -inf
    %703 = vmax.xlane.f32.xlu0 %v702
    %v704 = vpop.xlane.xlu0 %703
    %v705 = vsel %vm102, %v685, -inf
    %706 = vmax.xlane.f32.xlu0 %v705
    %v707 = vpop.xlane.xlu0 %706
    %v708 = vsel %vm102, %v686, -inf
    %709 = vmax.xlane.f32.xlu0 %v708
    %v710 = vpop.xlane.xlu0 %709
    %v711 = vsub.f32 %v679, %v689
    %v712 = vsub.f32 %v680, %v692
    %v713 = vsub.f32 %v681, %v695
    %v714 = vsub.f32 %v682, %v698
    %v715 = vsub.f32 %v683, %v701
    %v716 = vsub.f32 %v684, %v704
    %v717 = vsub.f32 %v685, %v707
    %v718 = vsub.f32 %v686, %v710
    %v719 = vmul.f32 %v711, 1.442695
    %v720 = vpow.pop %v719
    %v721 = vmul.f32 %v712, 1.442695
    %v722 = vpow.pop %v721
    %v723 = vmul.f32 %v713, 1.442695
    %v724 = vpow.pop %v723
    %v725 = vmul.f32 %v714, 1.442695
    %v726 = vpow.pop %v725
    %v727 = vmul.f32 %v715, 1.442695
    %v728 = vpow.pop %v727
    %v729 = vmul.f32 %v716, 1.442695
    %v730 = vpow.pop %v729
    %v731 = vmul.f32 %v717, 1.442695
    %v732 = vpow.pop %v731
    %v733 = vmul.f32 %v718, 1.442695
    %v734 = vpow.pop %v733
    %v735 = vsel %vm102, %v720, 0.0
    %736 = vadd.xlane.f32.xlu0 %v735
    %v737 = vpop.xlane.xlu0 %736
    %v738 = vsel %vm102, %v722, 0.0
    %739 = vadd.xlane.f32.xlu0 %v738
    %v740 = vpop.xlane.xlu0 %739
    %v741 = vsel %vm102, %v724, 0.0
    %742 = vadd.xlane.f32.xlu0 %v741
    %v743 = vpop.xlane.xlu0 %742
    %v744 = vsel %vm102, %v726, 0.0
    %745 = vadd.xlane.f32.xlu0 %v744
    %v746 = vpop.xlane.xlu0 %745
    %v747 = vsel %vm102, %v728, 0.0
    %748 = vadd.xlane.f32.xlu0 %v747
    %v749 = vpop.xlane.xlu0 %748
    %v750 = vsel %vm102, %v730, 0.0
    %751 = vadd.xlane.f32.xlu0 %v750
    %v752 = vpop.xlane.xlu0 %751
    %v753 = vsel %vm102, %v732, 0.0
    %754 = vadd.xlane.f32.xlu0 %v753
    %v755 = vpop.xlane.xlu0 %754
    %v756 = vsel %vm102, %v734, 0.0
    %757 = vadd.xlane.f32.xlu0 %v756
    %v758 = vpop.xlane.xlu0 %757
    %v759 = vrcp.pop %v737
    %v760 = vrcp.pop %v740
    %v761 = vrcp.pop %v743
    %v762 = vrcp.pop %v746
    %v763 = vrcp.pop %v749
    %v764 = vrcp.pop %v752
    %v765 = vrcp.pop %v755
    %v766 = vrcp.pop %v758
    %v767 = vmul.f32 %v720, %v759
    %v768 = vmul.f32 %v722, %v760
    %v769 = vmul.f32 %v724, %v761
    %v770 = vmul.f32 %v726, %v762
    %v771 = vmul.f32 %v728, %v763
    %v772 = vmul.f32 %v730, %v764
    %v773 = vmul.f32 %v732, %v765
    %v774 = vmul.f32 %v734, %v766
    %v776 = vsel %vm102, %v767, 0
    %778 = vmatprep.subr.mxu0 0.0
    %779 = vmatpush1.msra.mxu0 %v80
    %780 = vmatprep.subr.mxu0 0.0
    %781 = vmatpush1.msra.mxu0 0.0
    %782 = vmatprep.subr.mxu0 0.0
    %783 = vmatpush1.msra.mxu0 0.0
    %784 = vmatprep.subr.mxu0 0.0
    %785 = vmatpush1.msra.mxu0 0.0
    %786 = vmatprep.subr.mxu0 0.0
    %787 = vmatpush1.msra.mxu0 0.0
    %788 = vmatprep.subr.mxu0 0.0
    %789 = vmatpush1.msra.mxu0 0.0
    %790 = vmatprep.subr.mxu0 0.0
    %791 = vmatpush1.msra.mxu0 0.0
    %792 = vmatprep.subr.mxu0 0.0
    %793 = vmatpush1.msra.mxu0 0.0
    %794 = vmatprep.subr.mxu0 0.0
    %795 = vmatpush1.msra.mxu0 0.0
    %796 = vmatprep.subr.mxu0 0.0
    %797 = vmatpush1.msra.mxu0 0.0
    %798 = vmatprep.subr.mxu0 0.0
    %799 = vmatpush1.msra.mxu0 0.0
    %800 = vmatprep.subr.mxu0 0.0
    %801 = vmatpush1.msra.mxu0 0.0
    %802 = vmatprep.subr.mxu0 0.0
    %803 = vmatpush1.msra.mxu0 0.0
    %804 = vmatprep.subr.mxu0 0.0
    %805 = vmatpush1.msra.mxu0 0.0
    %806 = vmatprep.subr.mxu0 0.0
    %807 = vmatpush1.msra.mxu0 0.0
    %808 = vmatprep.subr.mxu0 0.0
    %809 = vmatpush1.msra.mxu0 0.0
    %810 = vmatprep.subr.mxu0 0.0
    %811 = vmatpush1.msra.mxu0 0.0
    %812 = vmatprep.subr.mxu0 0.0
    %813 = vmatpush1.msra.mxu0 0.0
    %814 = vmatprep.subr.mxu0 0.0
    %815 = vmatpush1.msra.mxu0 0.0
    %816 = vmatprep.subr.mxu0 0.0
    %817 = vmatpush1.msra.mxu0 0.0
    %818 = vmatprep.subr.mxu0 0.0
    %819 = vmatpush1.msra.mxu0 0.0
    %820 = vmatprep.subr.mxu0 0.0
    %821 = vmatpush1.msra.mxu0 0.0
    %822 = vmatprep.subr.mxu0 0.0
    %823 = vmatpush1.msra.mxu0 0.0
    %824 = vmatprep.subr.mxu0 0.0
    %825 = vmatpush1.msra.mxu0 0.0
    %826 = vmatprep.subr.mxu0 0.0
    %827 = vmatpush1.msra.mxu0 0.0
    %828 = vmatprep.subr.mxu0 0.0
    %829 = vmatpush1.msra.mxu0 0.0
    %830 = vmatprep.subr.mxu0 0.0
    %831 = vmatpush1.msra.mxu0 0.0
    %832 = vmatprep.subr.mxu0 0.0
    %833 = vmatpush1.msra.mxu0 0.0
    %834 = vmatprep.subr.mxu0 0.0
    %835 = vmatpush1.msra.mxu0 0.0
    %836 = vmatprep.subr.mxu0 0.0
    %837 = vmatpush1.msra.mxu0 0.0
    %838 = vmatprep.subr.mxu0 0.0
    %839 = vmatpush1.msra.mxu0 0.0
    %840 = vmatprep.subr.mxu0 0.0
    %841 = vmatpush1.msra.mxu0 0.0
    %842 = vmatprep.mubr.f32.mxu0 0.0
    %843 = vmatmul.mubr.f32.gmra.mrb[0].mxu0 %v776
    %v844 = vpop.f32.mrb[0].mxu0
    %v845 = vadd.f32 0.0, %v844
    %v846 = vpop.f32.mrb[0].mxu0
    %847 = vdwg.mxu0
    %v849 = vsel %vm102, %v768, 0
    %851 = vmatprep.subr.mxu0 0.0
    %852 = vmatpush1.msra.mxu0 %v81
    %853 = vmatprep.subr.mxu0 0.0
    %854 = vmatpush1.msra.mxu0 0.0
    %855 = vmatprep.subr.mxu0 0.0
    %856 = vmatpush1.msra.mxu0 0.0
    %857 = vmatprep.subr.mxu0 0.0
    %858 = vmatpush1.msra.mxu0 0.0
    %859 = vmatprep.subr.mxu0 0.0
    %860 = vmatpush1.msra.mxu0 0.0
    %861 = vmatprep.subr.mxu0 0.0
    %862 = vmatpush1.msra.mxu0 0.0
    %863 = vmatprep.subr.mxu0 0.0
    %864 = vmatpush1.msra.mxu0 0.0
    %865 = vmatprep.subr.mxu0 0.0
    %866 = vmatpush1.msra.mxu0 0.0
    %867 = vmatprep.subr.mxu0 0.0
    %868 = vmatpush1.msra.mxu0 0.0
    %869 = vmatprep.subr.mxu0 0.0
    %870 = vmatpush1.msra.mxu0 0.0
    %871 = vmatprep.subr.mxu0 0.0
    %872 = vmatpush1.msra.mxu0 0.0
    %873 = vmatprep.subr.mxu0 0.0
    %874 = vmatpush1.msra.mxu0 0.0
    %875 = vmatprep.subr.mxu0 0.0
    %876 = vmatpush1.msra.mxu0 0.0
    %877 = vmatprep.subr.mxu0 0.0
    %878 = vmatpush1.msra.mxu0 0.0
    %879 = vmatprep.subr.mxu0 0.0
    %880 = vmatpush1.msra.mxu0 0.0
    %881 = vmatprep.subr.mxu0 0.0
    %882 = vmatpush1.msra.mxu0 0.0
    %883 = vmatprep.subr.mxu0 0.0
    %884 = vmatpush1.msra.mxu0 0.0
    %885 = vmatprep.subr.mxu0 0.0
    %886 = vmatpush1.msra.mxu0 0.0
    %887 = vmatprep.subr.mxu0 0.0
    %888 = vmatpush1.msra.mxu0 0.0
    %889 = vmatprep.subr.mxu0 0.0
    %890 = vmatpush1.msra.mxu0 0.0
    %891 = vmatprep.subr.mxu0 0.0
    %892 = vmatpush1.msra.mxu0 0.0
    %893 = vmatprep.subr.mxu0 0.0
    %894 = vmatpush1.msra.mxu0 0.0
    %895 = vmatprep.subr.mxu0 0.0
    %896 = vmatpush1.msra.mxu0 0.0
    %897 = vmatprep.subr.mxu0 0.0
    %898 = vmatpush1.msra.mxu0 0.0
    %899 = vmatprep.subr.mxu0 0.0
    %900 = vmatpush1.msra.mxu0 0.0
    %901 = vmatprep.subr.mxu0 0.0
    %902 = vmatpush1.msra.mxu0 0.0
    %903 = vmatprep.subr.mxu0 0.0
    %904 = vmatpush1.msra.mxu0 0.0
    %905 = vmatprep.subr.mxu0 0.0
    %906 = vmatpush1.msra.mxu0 0.0
    %907 = vmatprep.subr.mxu0 0.0
    %908 = vmatpush1.msra.mxu0 0.0
    %909 = vmatprep.subr.mxu0 0.0
    %910 = vmatpush1.msra.mxu0 0.0
    %911 = vmatprep.subr.mxu0 0.0
    %912 = vmatpush1.msra.mxu0 0.0
    %913 = vmatprep.subr.mxu0 0.0
    %914 = vmatpush1.msra.mxu0 0.0
    %915 = vmatprep.mubr.f32.mxu0 0.0
    %916 = vmatmul.mubr.f32.gmra.mrb[0].mxu0 %v849
    %v917 = vpop.f32.mrb[0].mxu0
    %v918 = vadd.f32 0.0, %v917
    %v919 = vpop.f32.mrb[0].mxu0
    %920 = vdwg.mxu0
    %v922 = vsel %vm102, %v769, 0
    %924 = vmatprep.subr.mxu0 0.0
    %925 = vmatpush1.msra.mxu0 %v85
    %926 = vmatprep.subr.mxu0 0.0
    %927 = vmatpush1.msra.mxu0 0.0
    %928 = vmatprep.subr.mxu0 0.0
    %929 = vmatpush1.msra.mxu0 0.0
    %930 = vmatprep.subr.mxu0 0.0
    %931 = vmatpush1.msra.mxu0 0.0
    %932 = vmatprep.subr.mxu0 0.0
    %933 = vmatpush1.msra.mxu0 0.0
    %934 = vmatprep.subr.mxu0 0.0
    %935 = vmatpush1.msra.mxu0 0.0
    %936 = vmatprep.subr.mxu0 0.0
    %937 = vmatpush1.msra.mxu0 0.0
    %938 = vmatprep.subr.mxu0 0.0
    %939 = vmatpush1.msra.mxu0 0.0
    %940 = vmatprep.subr.mxu0 0.0
    %941 = vmatpush1.msra.mxu0 0.0
    %942 = vmatprep.subr.mxu0 0.0
    %943 = vmatpush1.msra.mxu0 0.0
    %944 = vmatprep.subr.mxu0 0.0
    %945 = vmatpush1.msra.mxu0 0.0
    %946 = vmatprep.subr.mxu0 0.0
    %947 = vmatpush1.msra.mxu0 0.0
    %948 = vmatprep.subr.mxu0 0.0
    %949 = vmatpush1.msra.mxu0 0.0
    %950 = vmatprep.subr.mxu0 0.0
    %951 = vmatpush1.msra.mxu0 0.0
    %952 = vmatprep.subr.mxu0 0.0
    %953 = vmatpush1.msra.mxu0 0.0
    %954 = vmatprep.subr.mxu0 0.0
    %955 = vmatpush1.msra.mxu0 0.0
    %956 = vmatprep.subr.mxu0 0.0
    %957 = vmatpush1.msra.mxu0 0.0
    %958 = vmatprep.subr.mxu0 0.0
    %959 = vmatpush1.msra.mxu0 0.0
    %960 = vmatprep.subr.mxu0 0.0
    %961 = vmatpush1.msra.mxu0 0.0
    %962 = vmatprep.subr.mxu0 0.0
    %963 = vmatpush1.msra.mxu0 0.0
    %964 = vmatprep.subr.mxu0 0.0
    %965 = vmatpush1.msra.mxu0 0.0
    %966 = vmatprep.subr.mxu0 0.0
    %967 = vmatpush1.msra.mxu0 0.0
    %968 = vmatprep.subr.mxu0 0.0
    %969 = vmatpush1.msra.mxu0 0.0
    %970 = vmatprep.subr.mxu0 0.0
    %971 = vmatpush1.msra.mxu0 0.0
    %972 = vmatprep.subr.mxu0 0.0
    %973 = vmatpush1.msra.mxu0 0.0
    %974 = vmatprep.subr.mxu0 0.0
    %975 = vmatpush1.msra.mxu0 0.0
    %976 = vmatprep.subr.mxu0 0.0
    %977 = vmatpush1.msra.mxu0 0.0
    %978 = vmatprep.subr.mxu0 0.0
    %979 = vmatpush1.msra.mxu0 0.0
    %980 = vmatprep.subr.mxu0 0.0
    %981 = vmatpush1.msra.mxu0 0.0
    %982 = vmatprep.subr.mxu0 0.0
    %983 = vmatpush1.msra.mxu0 0.0
    %984 = vmatprep.subr.mxu0 0.0
    %985 = vmatpush1.msra.mxu0 0.0
    %986 = vmatprep.subr.mxu0 0.0
    %987 = vmatpush1.msra.mxu0 0.0
    %988 = vmatprep.mubr.f32.mxu0 0.0
    %989 = vmatmul.mubr.f32.gmra.mrb[0].mxu0 %v922
    %v990 = vpop.f32.mrb[0].mxu0
    %v991 = vadd.f32 0.0, %v990
    %v992 = vpop.f32.mrb[0].mxu0
    %993 = vdwg.mxu0
    %v995 = vsel %vm102, %v770, 0
    %997 = vmatprep.subr.mxu0 0.0
    %998 = vmatpush1.msra.mxu0 %v87
    %999 = vmatprep.subr.mxu0 0.0
    %1000 = vmatpush1.msra.mxu0 0.0
    %1001 = vmatprep.subr.mxu0 0.0
    %1002 = vmatpush1.msra.mxu0 0.0
    %1003 = vmatprep.subr.mxu0 0.0
    %1004 = vmatpush1.msra.mxu0 0.0
    %1005 = vmatprep.subr.mxu0 0.0
    %1006 = vmatpush1.msra.mxu0 0.0
    %1007 = vmatprep.subr.mxu0 0.0
    %1008 = vmatpush1.msra.mxu0 0.0
    %1009 = vmatprep.subr.mxu0 0.0
    %1010 = vmatpush1.msra.mxu0 0.0
    %1011 = vmatprep.subr.mxu0 0.0
    %1012 = vmatpush1.msra.mxu0 0.0
    %1013 = vmatprep.subr.mxu0 0.0
    %1014 = vmatpush1.msra.mxu0 0.0
    %1015 = vmatprep.subr.mxu0 0.0
    %1016 = vmatpush1.msra.mxu0 0.0
    %1017 = vmatprep.subr.mxu0 0.0
    %1018 = vmatpush1.msra.mxu0 0.0
    %1019 = vmatprep.subr.mxu0 0.0
    %1020 = vmatpush1.msra.mxu0 0.0
    %1021 = vmatprep.subr.mxu0 0.0
    %1022 = vmatpush1.msra.mxu0 0.0
    %1023 = vmatprep.subr.mxu0 0.0
    %1024 = vmatpush1.msra.mxu0 0.0
    %1025 = vmatprep.subr.mxu0 0.0
    %1026 = vmatpush1.msra.mxu0 0.0
    %1027 = vmatprep.subr.mxu0 0.0
    %1028 = vmatpush1.msra.mxu0 0.0
    %1029 = vmatprep.subr.mxu0 0.0
    %1030 = vmatpush1.msra.mxu0 0.0
    %1031 = vmatprep.subr.mxu0 0.0
    %1032 = vmatpush1.msra.mxu0 0.0
    %1033 = vmatprep.subr.mxu0 0.0
    %1034 = vmatpush1.msra.mxu0 0.0
    %1035 = vmatprep.subr.mxu0 0.0
    %1036 = vmatpush1.msra.mxu0 0.0
    %1037 = vmatprep.subr.mxu0 0.0
    %1038 = vmatpush1.msra.mxu0 0.0
    %1039 = vmatprep.subr.mxu0 0.0
    %1040 = vmatpush1.msra.mxu0 0.0
    %1041 = vmatprep.subr.mxu0 0.0
    %1042 = vmatpush1.msra.mxu0 0.0
    %1043 = vmatprep.subr.mxu0 0.0
    %1044 = vmatpush1.msra.mxu0 0.0
    %1045 = vmatprep.subr.mxu0 0.0
    %1046 = vmatpush1.msra.mxu0 0.0
    %1047 = vmatprep.subr.mxu0 0.0
    %1048 = vmatpush1.msra.mxu0 0.0
    %1049 = vmatprep.subr.mxu0 0.0
    %1050 = vmatpush1.msra.mxu0 0.0
    %1051 = vmatprep.subr.mxu0 0.0
    %1052 = vmatpush1.msra.mxu0 0.0
    %1053 = vmatprep.subr.mxu0 0.0
    %1054 = vmatpush1.msra.mxu0 0.0
    %1055 = vmatprep.subr.mxu0 0.0
    %1056 = vmatpush1.msra.mxu0 0.0
    %1057 = vmatprep.subr.mxu0 0.0
    %1058 = vmatpush1.msra.mxu0 0.0
    %1059 = vmatprep.subr.mxu0 0.0
    %1060 = vmatpush1.msra.mxu0 0.0
    %1061 = vmatprep.mubr.f32.mxu0 0.0
    %1062 = vmatmul.mubr.f32.gmra.mrb[0].mxu0 %v995
    %v1063 = vpop.f32.mrb[0].mxu0
    %v1064 = vadd.f32 0.0, %v1063
    %v1065 = vpop.f32.mrb[0].mxu0
    %1066 = vdwg.mxu0
    %v1068 = vsel %vm102, %v771, 0
    %1070 = vmatprep.subr.mxu0 0.0
    %1071 = vmatpush1.msra.mxu0 %v91
    %1072 = vmatprep.subr.mxu0 0.0
    %1073 = vmatpush1.msra.mxu0 0.0
    %1074 = vmatprep.subr.mxu0 0.0
    %1075 = vmatpush1.msra.mxu0 0.0
    %1076 = vmatprep.subr.mxu0 0.0
    %1077 = vmatpush1.msra.mxu0 0.0
    %1078 = vmatprep.subr.mxu0 0.0
    %1079 = vmatpush1.msra.mxu0 0.0
    %1080 = vmatprep.subr.mxu0 0.0
    %1081 = vmatpush1.msra.mxu0 0.0
    %1082 = vmatprep.subr.mxu0 0.0
    %1083 = vmatpush1.msra.mxu0 0.0
    %1084 = vmatprep.subr.mxu0 0.0
    %1085 = vmatpush1.msra.mxu0 0.0
    %1086 = vmatprep.subr.mxu0 0.0
    %1087 = vmatpush1.msra.mxu0 0.0
    %1088 = vmatprep.subr.mxu0 0.0
    %1089 = vmatpush1.msra.mxu0 0.0
    %1090 = vmatprep.subr.mxu0 0.0
    %1091 = vmatpush1.msra.mxu0 0.0
    %1092 = vmatprep.subr.mxu0 0.0
    %1093 = vmatpush1.msra.mxu0 0.0
    %1094 = vmatprep.subr.mxu0 0.0
    %1095 = vmatpush1.msra.mxu0 0.0
    %1096 = vmatprep.subr.mxu0 0.0
    %1097 = vmatpush1.msra.mxu0 0.0
    %1098 = vmatprep.subr.mxu0 0.0
    %1099 = vmatpush1.msra.mxu0 0.0
    %1100 = vmatprep.subr.mxu0 0.0
    %1101 = vmatpush1.msra.mxu0 0.0
    %1102 = vmatprep.subr.mxu0 0.0
    %1103 = vmatpush1.msra.mxu0 0.0
    %1104 = vmatprep.subr.mxu0 0.0
    %1105 = vmatpush1.msra.mxu0 0.0
    %1106 = vmatprep.subr.mxu0 0.0
    %1107 = vmatpush1.msra.mxu0 0.0
    %1108 = vmatprep.subr.mxu0 0.0
    %1109 = vmatpush1.msra.mxu0 0.0
    %1110 = vmatprep.subr.mxu0 0.0
    %1111 = vmatpush1.msra.mxu0 0.0
    %1112 = vmatprep.subr.mxu0 0.0
    %1113 = vmatpush1.msra.mxu0 0.0
    %1114 = vmatprep.subr.mxu0 0.0
    %1115 = vmatpush1.msra.mxu0 0.0
    %1116 = vmatprep.subr.mxu0 0.0
    %1117 = vmatpush1.msra.mxu0 0.0
    %1118 = vmatprep.subr.mxu0 0.0
    %1119 = vmatpush1.msra.mxu0 0.0
    %1120 = vmatprep.subr.mxu0 0.0
    %1121 = vmatpush1.msra.mxu0 0.0
    %1122 = vmatprep.subr.mxu0 0.0
    %1123 = vmatpush1.msra.mxu0 0.0
    %1124 = vmatprep.subr.mxu0 0.0
    %1125 = vmatpush1.msra.mxu0 0.0
    %1126 = vmatprep.subr.mxu0 0.0
    %1127 = vmatpush1.msra.mxu0 0.0
    %1128 = vmatprep.subr.mxu0 0.0
    %1129 = vmatpush1.msra.mxu0 0.0
    %1130 = vmatprep.subr.mxu0 0.0
    %1131 = vmatpush1.msra.mxu0 0.0
    %1132 = vmatprep.subr.mxu0 0.0
    %1133 = vmatpush1.msra.mxu0 0.0
    %1134 = vmatprep.mubr.f32.mxu0 0.0
    %1135 = vmatmul.mubr.f32.gmra.mrb[0].mxu0 %v1068
    %v1136 = vpop.f32.mrb[0].mxu0
    %v1137 = vadd.f32 0.0, %v1136
    %v1138 = vpop.f32.mrb[0].mxu0
    %1139 = vdwg.mxu0
    %v1141 = vsel %vm102, %v772, 0
    %1143 = vmatprep.subr.mxu0 0.0
    %1144 = vmatpush1.msra.mxu0 %v93
    %1145 = vmatprep.subr.mxu0 0.0
    %1146 = vmatpush1.msra.mxu0 0.0
    %1147 = vmatprep.subr.mxu0 0.0
    %1148 = vmatpush1.msra.mxu0 0.0
    %1149 = vmatprep.subr.mxu0 0.0
    %1150 = vmatpush1.msra.mxu0 0.0
    %1151 = vmatprep.subr.mxu0 0.0
    %1152 = vmatpush1.msra.mxu0 0.0
    %1153 = vmatprep.subr.mxu0 0.0
    %1154 = vmatpush1.msra.mxu0 0.0
    %1155 = vmatprep.subr.mxu0 0.0
    %1156 = vmatpush1.msra.mxu0 0.0
    %1157 = vmatprep.subr.mxu0 0.0
    %1158 = vmatpush1.msra.mxu0 0.0
    %1159 = vmatprep.subr.mxu0 0.0
    %1160 = vmatpush1.msra.mxu0 0.0
    %1161 = vmatprep.subr.mxu0 0.0
    %1162 = vmatpush1.msra.mxu0 0.0
    %1163 = vmatprep.subr.mxu0 0.0
    %1164 = vmatpush1.msra.mxu0 0.0
    %1165 = vmatprep.subr.mxu0 0.0
    %1166 = vmatpush1.msra.mxu0 0.0
    %1167 = vmatprep.subr.mxu0 0.0
    %1168 = vmatpush1.msra.mxu0 0.0
    %1169 = vmatprep.subr.mxu0 0.0
    %1170 = vmatpush1.msra.mxu0 0.0
    %1171 = vmatprep.subr.mxu0 0.0
    %1172 = vmatpush1.msra.mxu0 0.0
    %1173 = vmatprep.subr.mxu0 0.0
    %1174 = vmatpush1.msra.mxu0 0.0
    %1175 = vmatprep.subr.mxu0 0.0
    %1176 = vmatpush1.msra.mxu0 0.0
    %1177 = vmatprep.subr.mxu0 0.0
    %1178 = vmatpush1.msra.mxu0 0.0
    %1179 = vmatprep.subr.mxu0 0.0
    %1180 = vmatpush1.msra.mxu0 0.0
    %1181 = vmatprep.subr.mxu0 0.0
    %1182 = vmatpush1.msra.mxu0 0.0
    %1183 = vmatprep.subr.mxu0 0.0
    %1184 = vmatpush1.msra.mxu0 0.0
    %1185 = vmatprep.subr.mxu0 0.0
    %1186 = vmatpush1.msra.mxu0 0.0
    %1187 = vmatprep.subr.mxu0 0.0
    %1188 = vmatpush1.msra.mxu0 0.0
    %1189 = vmatprep.subr.mxu0 0.0
    %1190 = vmatpush1.msra.mxu0 0.0
    %1191 = vmatprep.subr.mxu0 0.0
    %1192 = vmatpush1.msra.mxu0 0.0
    %1193 = vmatprep.subr.mxu0 0.0
    %1194 = vmatpush1.msra.mxu0 0.0
    %1195 = vmatprep.subr.mxu0 0.0
    %1196 = vmatpush1.msra.mxu0 0.0
    %1197 = vmatprep.subr.mxu0 0.0
    %1198 = vmatpush1.msra.mxu0 0.0
    %1199 = vmatprep.subr.mxu0 0.0
    %1200 = vmatpush1.msra.mxu0 0.0
    %1201 = vmatprep.subr.mxu0 0.0
    %1202 = vmatpush1.msra.mxu0 0.0
    %1203 = vmatprep.subr.mxu0 0.0
    %1204 = vmatpush1.msra.mxu0 0.0
    %1205 = vmatprep.subr.mxu0 0.0
    %1206 = vmatpush1.msra.mxu0 0.0
    %1207 = vmatprep.mubr.f32.mxu0 0.0
    %1208 = vmatmul.mubr.f32.gmra.mrb[0].mxu0 %v1141
    %v1209 = vpop.f32.mrb[0].mxu0
    %v1210 = vadd.f32 0.0, %v1209
    %v1211 = vpop.f32.mrb[0].mxu0
    %1212 = vdwg.mxu0
    %v1214 = vsel %vm102, %v773, 0
    %1216 = vmatprep.subr.mxu0 0.0
    %1217 = vmatpush1.msra.mxu0 %v97
    %1218 = vmatprep.subr.mxu0 0.0
    %1219 = vmatpush1.msra.mxu0 0.0
    %1220 = vmatprep.subr.mxu0 0.0
    %1221 = vmatpush1.msra.mxu0 0.0
    %1222 = vmatprep.subr.mxu0 0.0
    %1223 = vmatpush1.msra.mxu0 0.0
    %1224 = vmatprep.subr.mxu0 0.0
    %1225 = vmatpush1.msra.mxu0 0.0
    %1226 = vmatprep.subr.mxu0 0.0
    %1227 = vmatpush1.msra.mxu0 0.0
    %1228 = vmatprep.subr.mxu0 0.0
    %1229 = vmatpush1.msra.mxu0 0.0
    %1230 = vmatprep.subr.mxu0 0.0
    %1231 = vmatpush1.msra.mxu0 0.0
    %1232 = vmatprep.subr.mxu0 0.0
    %1233 = vmatpush1.msra.mxu0 0.0
    %1234 = vmatprep.subr.mxu0 0.0
    %1235 = vmatpush1.msra.mxu0 0.0
    %1236 = vmatprep.subr.mxu0 0.0
    %1237 = vmatpush1.msra.mxu0 0.0
    %1238 = vmatprep.subr.mxu0 0.0
    %1239 = vmatpush1.msra.mxu0 0.0
    %1240 = vmatprep.subr.mxu0 0.0
    %1241 = vmatpush1.msra.mxu0 0.0
    %1242 = vmatprep.subr.mxu0 0.0
    %1243 = vmatpush1.msra.mxu0 0.0
    %1244 = vmatprep.subr.mxu0 0.0
    %1245 = vmatpush1.msra.mxu0 0.0
    %1246 = vmatprep.subr.mxu0 0.0
    %1247 = vmatpush1.msra.mxu0 0.0
    %1248 = vmatprep.subr.mxu0 0.0
    %1249 = vmatpush1.msra.mxu0 0.0
    %1250 = vmatprep.subr.mxu0 0.0
    %1251 = vmatpush1.msra.mxu0 0.0
    %1252 = vmatprep.subr.mxu0 0.0
    %1253 = vmatpush1.msra.mxu0 0.0
    %1254 = vmatprep.subr.mxu0 0.0
    %1255 = vmatpush1.msra.mxu0 0.0
    %1256 = vmatprep.subr.mxu0 0.0
    %1257 = vmatpush1.msra.mxu0 0.0
    %1258 = vmatprep.subr.mxu0 0.0
    %1259 = vmatpush1.msra.mxu0 0.0
    %1260 = vmatprep.subr.mxu0 0.0
    %1261 = vmatpush1.msra.mxu0 0.0
    %1262 = vmatprep.subr.mxu0 0.0
    %1263 = vmatpush1.msra.mxu0 0.0
    %1264 = vmatprep.subr.mxu0 0.0
    %1265 = vmatpush1.msra.mxu0 0.0
    %1266 = vmatprep.subr.mxu0 0.0
    %1267 = vmatpush1.msra.mxu0 0.0
    %1268 = vmatprep.subr.mxu0 0.0
    %1269 = vmatpush1.msra.mxu0 0.0
    %1270 = vmatprep.subr.mxu0 0.0
    %1271 = vmatpush1.msra.mxu0 0.0
    %1272 = vmatprep.subr.mxu0 0.0
    %1273 = vmatpush1.msra.mxu0 0.0
    %1274 = vmatprep.subr.mxu0 0.0
    %1275 = vmatpush1.msra.mxu0 0.0
    %1276 = vmatprep.subr.mxu0 0.0
    %1277 = vmatpush1.msra.mxu0 0.0
    %1278 = vmatprep.subr.mxu0 0.0
    %1279 = vmatpush1.msra.mxu0 0.0
    %1280 = vmatprep.mubr.f32.mxu0 0.0
    %1281 = vmatmul.mubr.f32.gmra.mrb[0].mxu0 %v1214
    %v1282 = vpop.f32.mrb[0].mxu0
    %v1283 = vadd.f32 0.0, %v1282
    %v1284 = vpop.f32.mrb[0].mxu0
    %1285 = vdwg.mxu0
    %v1287 = vsel %vm102, %v774, 0
    %1289 = vmatprep.subr.mxu0 0.0
    %1290 = vmatpush1.msra.mxu0 %v99
    %1291 = vmatprep.subr.mxu0 0.0
    %1292 = vmatpush1.msra.mxu0 0.0
    %1293 = vmatprep.subr.mxu0 0.0
    %1294 = vmatpush1.msra.mxu0 0.0
    %1295 = vmatprep.subr.mxu0 0.0
    %1296 = vmatpush1.msra.mxu0 0.0
    %1297 = vmatprep.subr.mxu0 0.0
    %1298 = vmatpush1.msra.mxu0 0.0
    %1299 = vmatprep.subr.mxu0 0.0
    %1300 = vmatpush1.msra.mxu0 0.0
    %1301 = vmatprep.subr.mxu0 0.0
    %1302 = vmatpush1.msra.mxu0 0.0
    %1303 = vmatprep.subr.mxu0 0.0
    %1304 = vmatpush1.msra.mxu0 0.0
    %1305 = vmatprep.subr.mxu0 0.0
    %1306 = vmatpush1.msra.mxu0 0.0
    %1307 = vmatprep.subr.mxu0 0.0
    %1308 = vmatpush1.msra.mxu0 0.0
    %1309 = vmatprep.subr.mxu0 0.0
    %1310 = vmatpush1.msra.mxu0 0.0
    %1311 = vmatprep.subr.mxu0 0.0
    %1312 = vmatpush1.msra.mxu0 0.0
    %1313 = vmatprep.subr.mxu0 0.0
    %1314 = vmatpush1.msra.mxu0 0.0
    %1315 = vmatprep.subr.mxu0 0.0
    %1316 = vmatpush1.msra.mxu0 0.0
    %1317 = vmatprep.subr.mxu0 0.0
    %1318 = vmatpush1.msra.mxu0 0.0
    %1319 = vmatprep.subr.mxu0 0.0
    %1320 = vmatpush1.msra.mxu0 0.0
    %1321 = vmatprep.subr.mxu0 0.0
    %1322 = vmatpush1.msra.mxu0 0.0
    %1323 = vmatprep.subr.mxu0 0.0
    %1324 = vmatpush1.msra.mxu0 0.0
    %1325 = vmatprep.subr.mxu0 0.0
    %1326 = vmatpush1.msra.mxu0 0.0
    %1327 = vmatprep.subr.mxu0 0.0
    %1328 = vmatpush1.msra.mxu0 0.0
    %1329 = vmatprep.subr.mxu0 0.0
    %1330 = vmatpush1.msra.mxu0 0.0
    %1331 = vmatprep.subr.mxu0 0.0
    %1332 = vmatpush1.msra.mxu0 0.0
    %1333 = vmatprep.subr.mxu0 0.0
    %1334 = vmatpush1.msra.mxu0 0.0
    %1335 = vmatprep.subr.mxu0 0.0
    %1336 = vmatpush1.msra.mxu0 0.0
    %1337 = vmatprep.subr.mxu0 0.0
    %1338 = vmatpush1.msra.mxu0 0.0
    %1339 = vmatprep.subr.mxu0 0.0
    %1340 = vmatpush1.msra.mxu0 0.0
    %1341 = vmatprep.subr.mxu0 0.0
    %1342 = vmatpush1.msra.mxu0 0.0
    %1343 = vmatprep.subr.mxu0 0.0
    %1344 = vmatpush1.msra.mxu0 0.0
    %1345 = vmatprep.subr.mxu0 0.0
    %1346 = vmatpush1.msra.mxu0 0.0
    %1347 = vmatprep.subr.mxu0 0.0
    %1348 = vmatpush1.msra.mxu0 0.0
    %1349 = vmatprep.subr.mxu0 0.0
    %1350 = vmatpush1.msra.mxu0 0.0
    %1351 = vmatprep.subr.mxu0 0.0
    %1352 = vmatpush1.msra.mxu0 0.0
    %1353 = vmatprep.mubr.f32.mxu0 0.0
    %1354 = vmatmul.mubr.f32.gmra.mrb[0].mxu0 %v1287
    %v1355 = vpop.f32.mrb[0].mxu0
    %v1356 = vadd.f32 0.0, %v1355
    %v1357 = vpop.f32.mrb[0].mxu0
    %1358 = vdwg.mxu0
    %1361 = vrot.lane.b32.xlu0 %v991, 8
    %v1362 = vpop.permute.xlu0 %1361
    %1363 = vrot.lane.b32.xlu0 %v1064, 8
    %v1364 = vpop.permute.xlu0 %1363
    %1369 = vrot.lane.b32.xlu0 %v1137, 16
    %v1370 = vpop.permute.xlu0 %1369
    %1371 = vrot.lane.b32.xlu0 %v1210, 16
    %v1372 = vpop.permute.xlu0 %1371
    %1377 = vrot.lane.b32.xlu0 %v1283, 24
    %v1378 = vpop.permute.xlu0 %1377
    %1379 = vrot.lane.b32.xlu0 %v1356, 24
    %v1380 = vpop.permute.xlu0 %1379
    %v1383 = vsel %vm102, %v845, %v1362
    %v1384 = vsel %vm102, %v918, %v1364
    %vm1385 = vcmask 130048
    %v1386 = vsel %vm1385, %v1383, %v1370
    %v1387 = vsel %vm1385, %v1384, %v1372
    %vm1388 = vcmask 195584
    %v1389 = vsel %vm1388, %v1386, %v1378
    %v1390 = vsel %vm1388, %v1387, %v1380
    %v1391 = vadd.f32 %v34, %v1389
    %v1392 = vadd.f32 %v35, %v1390
    %v1393 = vld [vmem:[%s3] sm:$0x1]
    %v1394 = vld [vmem:[%s4] sm:$0x1]
    %v1395 = vsel %vm38, %v1391, 0.0
    %1396 = vadd.xlane.f32.xlu0 %v1395
    %v1397 = vpop.xlane.xlu0 %1396
    %v1398 = vsel %vm38, %v1392, 0.0
    %1399 = vadd.xlane.f32.xlu0 %v1398
    %v1400 = vpop.xlane.xlu0 %1399
    %v1401 = vmul.f32 %v1397, %v45
    %v1402 = vmul.f32 %v1400, %v45
    %v1403 = vsub.f32 %v1391, %v1401
    %v1404 = vsub.f32 %v1392, %v1402
    %v1405 = vmul.f32 %v1403, %v1403
    %v1406 = vmul.f32 %v1404, %v1404
    %v1407 = vsel %vm38, %v1405, 0.0
    %1408 = vadd.xlane.f32.xlu0 %v1407
    %v1409 = vpop.xlane.xlu0 %1408
    %v1410 = vsel %vm38, %v1406, 0.0
    %1411 = vadd.xlane.f32.xlu0 %v1410
    %v1412 = vpop.xlane.xlu0 %1411
    %v1413 = vmul.f32 %v1409, %v45
    %v1414 = vmul.f32 %v1412, %v45
    %v1415 = vadd.f32 %v1413, 1e-05
    %v1416 = vadd.f32 %v1414, 1e-05
    %v1417 = vrsqrt.pop %v1415
    %v1418 = vrsqrt.pop %v1416
    %v1419 = vmul.f32 %v1403, %v1417
    %v1420 = vmul.f32 %v1404, %v1418
    %v1422 = vlaneseq
    %v1423 = vshrl.u32 %v1422, 7
    %v1424 = vsub.s32 0, %v1423
    %v1425 = vrot.slane %v1393, %v1424
    %v1427 = vmul.f32 %v1419, %v1425
    %v1428 = vmul.f32 %v1420, %v1425
    %v1430 = vlaneseq
    %v1431 = vshrl.u32 %v1430, 7
    %v1432 = vsub.s32 0, %v1431
    %v1433 = vrot.slane %v1394, %v1432
    %v1435 = vadd.f32 %v1427, %v1433
    %v1436 = vadd.f32 %v1428, %v1433
    %v1437 = vpack.c.bf16 %v1436, %v1435
    %v1438 = vld [vmem:[%s5] sm:$0xff]
    %v1439 = vld [vmem:[%s5 + $0x8] sm:$0xff]
    %v1440 = vld [vmem:[%s5 + $0x10] sm:$0xff]
    %v1441 = vld [vmem:[%s5 + $0x18] sm:$0xff]
    %v1442 = vld [vmem:[%s5 + $0x20] sm:$0xff]
    %v1443 = vld [vmem:[%s5 + $0x28] sm:$0xff]
    %v1444 = vld [vmem:[%s5 + $0x30] sm:$0xff]
    %v1445 = vld [vmem:[%s5 + $0x38] sm:$0xff]
    %v1446 = vld [vmem:[%s5 + $0x40] sm:$0xff]
    %v1447 = vld [vmem:[%s5 + $0x48] sm:$0xff]
    %v1448 = vld [vmem:[%s5 + $0x50] sm:$0xff]
    %v1449 = vld [vmem:[%s5 + $0x58] sm:$0xff]
    %v1450 = vld [vmem:[%s5 + $0x60] sm:$0xff]
    %v1451 = vld [vmem:[%s5 + $0x68] sm:$0xff]
    %v1452 = vld [vmem:[%s5 + $0x70] sm:$0xff]
    %v1453 = vld [vmem:[%s5 + $0x78] sm:$0xff]
    %v1454 = vld [vmem:[%s6] sm:$0xff]
    %v1456 = vlaneseq
    %v1457 = vshrl.u32 %v1456, 7
    %v1458 = vsub.s32 0, %v1457
    %v1459 = vrot.slane %v1454, %v1458
    %v1460 = vlaneseq
    %v1461 = vshrl.u32 %v1460, 7
    %v1462 = vsub.s32 1, %v1461
    %v1463 = vrot.slane %v1454, %v1462
    %v1464 = vlaneseq
    %v1465 = vshrl.u32 %v1464, 7
    %v1466 = vsub.s32 2, %v1465
    %v1467 = vrot.slane %v1454, %v1466
    %v1468 = vlaneseq
    %v1469 = vshrl.u32 %v1468, 7
    %v1470 = vsub.s32 3, %v1469
    %v1471 = vrot.slane %v1454, %v1470
    %v1472 = vlaneseq
    %v1473 = vshrl.u32 %v1472, 7
    %v1474 = vsub.s32 4, %v1473
    %v1475 = vrot.slane %v1454, %v1474
    %v1476 = vlaneseq
    %v1477 = vshrl.u32 %v1476, 7
    %v1478 = vsub.s32 5, %v1477
    %v1479 = vrot.slane %v1454, %v1478
    %v1480 = vlaneseq
    %v1481 = vshrl.u32 %v1480, 7
    %v1482 = vsub.s32 6, %v1481
    %v1483 = vrot.slane %v1454, %v1482
    %v1484 = vlaneseq
    %v1485 = vshrl.u32 %v1484, 7
    %v1486 = vsub.s32 7, %v1485
    %v1487 = vrot.slane %v1454, %v1486
    %v1512 = vunpack.c.l.b16 %v1438
    %v1513 = vunpack.c.h.b16 %v1438
    %v1514 = vunpack.c.l.b16 %v1439
    %v1515 = vunpack.c.h.b16 %v1439
    %v1516 = vunpack.c.l.b16 %v1440
    %v1517 = vunpack.c.h.b16 %v1440
    %v1518 = vunpack.c.l.b16 %v1441
    %v1519 = vunpack.c.h.b16 %v1441
    %v1520 = vunpack.c.l.b16 %v1442
    %v1521 = vunpack.c.h.b16 %v1442
    %v1522 = vunpack.c.l.b16 %v1443
    %v1523 = vunpack.c.h.b16 %v1443
    %v1524 = vunpack.c.l.b16 %v1444
    %v1525 = vunpack.c.h.b16 %v1444
    %v1526 = vunpack.c.l.b16 %v1445
    %v1527 = vunpack.c.h.b16 %v1445
    %v1528 = vunpack.c.l.b16 %v1446
    %v1529 = vunpack.c.h.b16 %v1446
    %v1530 = vunpack.c.l.b16 %v1447
    %v1531 = vunpack.c.h.b16 %v1447
    %v1532 = vunpack.c.l.b16 %v1448
    %v1533 = vunpack.c.h.b16 %v1448
    %v1534 = vunpack.c.l.b16 %v1449
    %v1535 = vunpack.c.h.b16 %v1449
    %v1536 = vunpack.c.l.b16 %v1450
    %v1537 = vunpack.c.h.b16 %v1450
    %v1538 = vunpack.c.l.b16 %v1451
    %v1539 = vunpack.c.h.b16 %v1451
    %v1540 = vunpack.c.l.b16 %v1452
    %v1541 = vunpack.c.h.b16 %v1452
    %v1542 = vunpack.c.l.b16 %v1453
    %v1543 = vunpack.c.h.b16 %v1453
    %v1544 = vpack.c.b16 %v1520, %v1512
    %v1545 = vpack.c.b16 %v1521, %v1513
    %v1546 = vpack.c.b16 %v1522, %v1514
    %v1547 = vpack.c.b16 %v1523, %v1515
    %v1548 = vpack.c.b16 %v1524, %v1516
    %v1549 = vpack.c.b16 %v1525, %v1517
    %v1550 = vpack.c.b16 %v1526, %v1518
    %v1551 = vpack.c.b16 %v1527, %v1519
    %v1552 = vpack.c.b16 %v1536, %v1528
    %v1553 = vpack.c.b16 %v1537, %v1529
    %v1554 = vpack.c.b16 %v1538, %v1530
    %v1555 = vpack.c.b16 %v1539, %v1531
    %v1556 = vpack.c.b16 %v1540, %v1532
    %v1557 = vpack.c.b16 %v1541, %v1533
    %v1558 = vpack.c.b16 %v1542, %v1534
    %v1559 = vpack.c.b16 %v1543, %v1535
    %v1577 = vsel %vm38, %v1437, 0
    %1579 = vmatprep.subr.bf16.mxu0 %v1545
    %1580 = vmatpush1.bf16.msra.mxu0 %v1544
    %1581 = vmatprep.subr.bf16.mxu0 %v1553
    %1582 = vmatpush1.bf16.msra.mxu0 %v1552
    %1583 = vmatprep.subr.bf16.mxu0 0
    %1584 = vmatpush1.bf16.msra.mxu0 0
    %1585 = vmatprep.subr.bf16.mxu0 0
    %1586 = vmatpush1.bf16.msra.mxu0 0
    %1587 = vmatprep.subr.bf16.mxu0 0
    %1588 = vmatpush1.bf16.msra.mxu0 0
    %1589 = vmatprep.subr.bf16.mxu0 0
    %1590 = vmatpush1.bf16.msra.mxu0 0
    %1591 = vmatprep.subr.bf16.mxu0 0
    %1592 = vmatpush1.bf16.msra.mxu0 0
    %1593 = vmatprep.subr.bf16.mxu0 0
    %1594 = vmatpush1.bf16.msra.mxu0 0
    %1595 = vmatprep.subr.bf16.mxu0 0
    %1596 = vmatpush1.bf16.msra.mxu0 0
    %1597 = vmatprep.subr.bf16.mxu0 0
    %1598 = vmatpush1.bf16.msra.mxu0 0
    %1599 = vmatprep.subr.bf16.mxu0 0
    %1600 = vmatpush1.bf16.msra.mxu0 0
    %1601 = vmatprep.subr.bf16.mxu0 0
    %1602 = vmatpush1.bf16.msra.mxu0 0
    %1603 = vmatprep.subr.bf16.mxu0 0
    %1604 = vmatpush1.bf16.msra.mxu0 0
    %1605 = vmatprep.subr.bf16.mxu0 0
    %1606 = vmatpush1.bf16.msra.mxu0 0
    %1607 = vmatprep.subr.bf16.mxu0 0
    %1608 = vmatpush1.bf16.msra.mxu0 0
    %1609 = vmatprep.subr.bf16.mxu0 0
    %1610 = vmatpush1.bf16.msra.mxu0 0
    %1611 = vmatprep.mubr.bf16.mxu0 0
    %1612 = vmatmul.mubr.bf16.gmra.mrb[0].mxu0 %v1577
    %v1613 = vpop.f32.mrb[0].mxu0
    %v1614 = vadd.f32 %v1459, %v1613
    %v1615 = vpop.f32.mrb[0].mxu0
    %v1616 = vadd.f32 %v1463, %v1615
    %v1617 = vpop.f32.mrb[0].mxu0
    %v1618 = vadd.f32 %v1459, %v1617
    %v1619 = vpop.f32.mrb[0].mxu0
    %v1620 = vadd.f32 %v1463, %v1619
    %1621 = vdwg.mxu0
    %1622 = vmatprep.subr.bf16.mxu0 %v1547
    %1623 = vmatpush1.bf16.msra.mxu0 %v1546
    %1624 = vmatprep.subr.bf16.mxu0 %v1555
    %1625 = vmatpush1.bf16.msra.mxu0 %v1554
    %1626 = vmatprep.subr.bf16.mxu0 0
    %1627 = vmatpush1.bf16.msra.mxu0 0
    %1628 = vmatprep.subr.bf16.mxu0 0
    %1629 = vmatpush1.bf16.msra.mxu0 0
    %1630 = vmatprep.subr.bf16.mxu0 0
    %1631 = vmatpush1.bf16.msra.mxu0 0
    %1632 = vmatprep.subr.bf16.mxu0 0
    %1633 = vmatpush1.bf16.msra.mxu0 0
    %1634 = vmatprep.subr.bf16.mxu0 0
    %1635 = vmatpush1.bf16.msra.mxu0 0
    %1636 = vmatprep.subr.bf16.mxu0 0
    %1637 = vmatpush1.bf16.msra.mxu0 0
    %1638 = vmatprep.subr.bf16.mxu0 0
    %1639 = vmatpush1.bf16.msra.mxu0 0
    %1640 = vmatprep.subr.bf16.mxu0 0
    %1641 = vmatpush1.bf16.msra.mxu0 0
    %1642 = vmatprep.subr.bf16.mxu0 0
    %1643 = vmatpush1.bf16.msra.mxu0 0
    %1644 = vmatprep.subr.bf16.mxu0 0
    %1645 = vmatpush1.bf16.msra.mxu0 0
    %1646 = vmatprep.subr.bf16.mxu0 0
    %1647 = vmatpush1.bf16.msra.mxu0 0
    %1648 = vmatprep.subr.bf16.mxu0 0
    %1649 = vmatpush1.bf16.msra.mxu0 0
    %1650 = vmatprep.subr.bf16.mxu0 0
    %1651 = vmatpush1.bf16.msra.mxu0 0
    %1652 = vmatprep.subr.bf16.mxu0 0
    %1653 = vmatpush1.bf16.msra.mxu0 0
    %1654 = vmatprep.mubr.bf16.mxu0 0
    %1655 = vmatmul.mubr.bf16.gmra.mrb[0].mxu0 %v1577
    %v1656 = vpop.f32.mrb[0].mxu0
    %v1657 = vadd.f32 %v1467, %v1656
    %v1658 = vpop.f32.mrb[0].mxu0
    %v1659 = vadd.f32 %v1471, %v1658
    %v1660 = vpop.f32.mrb[0].mxu0
    %v1661 = vadd.f32 %v1467, %v1660
    %v1662 = vpop.f32.mrb[0].mxu0
    %v1663 = vadd.f32 %v1471, %v1662
    %1664 = vdwg.mxu0
    %1665 = vmatprep.subr.bf16.mxu0 %v1549
    %1666 = vmatpush1.bf16.msra.mxu0 %v1548
    %1667 = vmatprep.subr.bf16.mxu0 %v1557
    %1668 = vmatpush1.bf16.msra.mxu0 %v1556
    %1669 = vmatprep.subr.bf16.mxu0 0
    %1670 = vmatpush1.bf16.msra.mxu0 0
    %1671 = vmatprep.subr.bf16.mxu0 0
    %1672 = vmatpush1.bf16.msra.mxu0 0
    %1673 = vmatprep.subr.bf16.mxu0 0
    %1674 = vmatpush1.bf16.msra.mxu0 0
    %1675 = vmatprep.subr.bf16.mxu0 0
    %1676 = vmatpush1.bf16.msra.mxu0 0
    %1677 = vmatprep.subr.bf16.mxu0 0
    %1678 = vmatpush1.bf16.msra.mxu0 0
    %1679 = vmatprep.subr.bf16.mxu0 0
    %1680 = vmatpush1.bf16.msra.mxu0 0
    %1681 = vmatprep.subr.bf16.mxu0 0
    %1682 = vmatpush1.bf16.msra.mxu0 0
    %1683 = vmatprep.subr.bf16.mxu0 0
    %1684 = vmatpush1.bf16.msra.mxu0 0
    %1685 = vmatprep.subr.bf16.mxu0 0
    %1686 = vmatpush1.bf16.msra.mxu0 0
    %1687 = vmatprep.subr.bf16.mxu0 0
    %1688 = vmatpush1.bf16.msra.mxu0 0
    %1689 = vmatprep.subr.bf16.mxu0 0
    %1690 = vmatpush1.bf16.msra.mxu0 0
    %1691 = vmatprep.subr.bf16.mxu0 0
    %1692 = vmatpush1.bf16.msra.mxu0 0
    %1693 = vmatprep.subr.bf16.mxu0 0
    %1694 = vmatpush1.bf16.msra.mxu0 0
    %1695 = vmatprep.subr.bf16.mxu0 0
    %1696 = vmatpush1.bf16.msra.mxu0 0
    %1697 = vmatprep.mubr.bf16.mxu0 0
    %1698 = vmatmul.mubr.bf16.gmra.mrb[0].mxu0 %v1577
    %v1699 = vpop.f32.mrb[0].mxu0
    %v1700 = vadd.f32 %v1475, %v1699
    %v1701 = vpop.f32.mrb[0].mxu0
    %v1702 = vadd.f32 %v1479, %v1701
    %v1703 = vpop.f32.mrb[0].mxu0
    %v1704 = vadd.f32 %v1475, %v1703
    %v1705 = vpop.f32.mrb[0].mxu0
    %v1706 = vadd.f32 %v1479, %v1705
    %1707 = vdwg.mxu0
    %1708 = vmatprep.subr.bf16.mxu0 %v1551
    %1709 = vmatpush1.bf16.msra.mxu0 %v1550
    %1710 = vmatprep.subr.bf16.mxu0 %v1559
    %1711 = vmatpush1.bf16.msra.mxu0 %v1558
    %1712 = vmatprep.subr.bf16.mxu0 0
    %1713 = vmatpush1.bf16.msra.mxu0 0
    %1714 = vmatprep.subr.bf16.mxu0 0
    %1715 = vmatpush1.bf16.msra.mxu0 0
    %1716 = vmatprep.subr.bf16.mxu0 0
    %1717 = vmatpush1.bf16.msra.mxu0 0
    %1718 = vmatprep.subr.bf16.mxu0 0
    %1719 = vmatpush1.bf16.msra.mxu0 0
    %1720 = vmatprep.subr.bf16.mxu0 0
    %1721 = vmatpush1.bf16.msra.mxu0 0
    %1722 = vmatprep.subr.bf16.mxu0 0
    %1723 = vmatpush1.bf16.msra.mxu0 0
    %1724 = vmatprep.subr.bf16.mxu0 0
    %1725 = vmatpush1.bf16.msra.mxu0 0
    %1726 = vmatprep.subr.bf16.mxu0 0
    %1727 = vmatpush1.bf16.msra.mxu0 0
    %1728 = vmatprep.subr.bf16.mxu0 0
    %1729 = vmatpush1.bf16.msra.mxu0 0
    %1730 = vmatprep.subr.bf16.mxu0 0
    %1731 = vmatpush1.bf16.msra.mxu0 0
    %1732 = vmatprep.subr.bf16.mxu0 0
    %1733 = vmatpush1.bf16.msra.mxu0 0
    %1734 = vmatprep.subr.bf16.mxu0 0
    %1735 = vmatpush1.bf16.msra.mxu0 0
    %1736 = vmatprep.subr.bf16.mxu0 0
    %1737 = vmatpush1.bf16.msra.mxu0 0
    %1738 = vmatprep.subr.bf16.mxu0 0
    %1739 = vmatpush1.bf16.msra.mxu0 0
    %1740 = vmatprep.mubr.bf16.mxu0 0
    %1741 = vmatmul.mubr.bf16.gmra.mrb[0].mxu0 %v1577
    %v1742 = vpop.f32.mrb[0].mxu0
    %v1743 = vadd.f32 %v1483, %v1742
    %v1744 = vpop.f32.mrb[0].mxu0
    %v1745 = vadd.f32 %v1487, %v1744
    %v1746 = vpop.f32.mrb[0].mxu0
    %v1747 = vadd.f32 %v1483, %v1746
    %v1748 = vpop.f32.mrb[0].mxu0
    %v1749 = vadd.f32 %v1487, %v1748
    %1750 = vdwg.mxu0
    %v1751 = vmax.f32 %v1614, 0.0
    %v1752 = vmax.f32 %v1616, 0.0
    %v1753 = vmax.f32 %v1657, 0.0
    %v1754 = vmax.f32 %v1659, 0.0
    %v1755 = vmax.f32 %v1700, 0.0
    %v1756 = vmax.f32 %v1702, 0.0
    %v1757 = vmax.f32 %v1743, 0.0
    %v1758 = vmax.f32 %v1745, 0.0
    %v1759 = vmax.f32 %v1618, 0.0
    %v1760 = vmax.f32 %v1620, 0.0
    %v1761 = vmax.f32 %v1661, 0.0
    %v1762 = vmax.f32 %v1663, 0.0
    %v1763 = vmax.f32 %v1704, 0.0
    %v1764 = vmax.f32 %v1706, 0.0
    %v1765 = vmax.f32 %v1747, 0.0
    %v1766 = vmax.f32 %v1749, 0.0
    %v1767 = vpack.c.bf16 %v1759, %v1751
    %v1768 = vpack.c.bf16 %v1760, %v1752
    %v1769 = vpack.c.bf16 %v1761, %v1753
    %v1770 = vpack.c.bf16 %v1762, %v1754
    %v1771 = vpack.c.bf16 %v1763, %v1755
    %v1772 = vpack.c.bf16 %v1764, %v1756
    %v1773 = vpack.c.bf16 %v1765, %v1757
    %v1774 = vpack.c.bf16 %v1766, %v1758
    %v1775 = vld [vmem:[%s7] sm:$0xf]
    %v1776 = vld [vmem:[%s7 + $0x4] sm:$0xf]
    %v1777 = vld [vmem:[%s7 + $0x8] sm:$0xf]
    %v1778 = vld [vmem:[%s7 + $0xc] sm:$0xf]
    %v1779 = vld [vmem:[%s7 + $0x10] sm:$0xf]
    %v1780 = vld [vmem:[%s7 + $0x14] sm:$0xf]
    %v1781 = vld [vmem:[%s7 + $0x18] sm:$0xf]
    %v1782 = vld [vmem:[%s7 + $0x1c] sm:$0xf]
    %v1783 = vld [vmem:[%s7 + $0x20] sm:$0xf]
    %v1784 = vld [vmem:[%s7 + $0x24] sm:$0xf]
    %v1785 = vld [vmem:[%s7 + $0x28] sm:$0xf]
    %v1786 = vld [vmem:[%s7 + $0x2c] sm:$0xf]
    %v1787 = vld [vmem:[%s7 + $0x30] sm:$0xf]
    %v1788 = vld [vmem:[%s7 + $0x34] sm:$0xf]
    %v1789 = vld [vmem:[%s7 + $0x38] sm:$0xf]
    %v1790 = vld [vmem:[%s7 + $0x3c] sm:$0xf]
    %v1791 = vld [vmem:[%s7 + $0x40] sm:$0xf]
    %v1792 = vld [vmem:[%s7 + $0x44] sm:$0xf]
    %v1793 = vld [vmem:[%s7 + $0x48] sm:$0xf]
    %v1794 = vld [vmem:[%s7 + $0x4c] sm:$0xf]
    %v1795 = vld [vmem:[%s7 + $0x50] sm:$0xf]
    %v1796 = vld [vmem:[%s7 + $0x54] sm:$0xf]
    %v1797 = vld [vmem:[%s7 + $0x58] sm:$0xf]
    %v1798 = vld [vmem:[%s7 + $0x5c] sm:$0xf]
    %v1799 = vld [vmem:[%s7 + $0x60] sm:$0xf]
    %v1800 = vld [vmem:[%s7 + $0x64] sm:$0xf]
    %v1801 = vld [vmem:[%s7 + $0x68] sm:$0xf]
    %v1802 = vld [vmem:[%s7 + $0x6c] sm:$0xf]
    %v1803 = vld [vmem:[%s7 + $0x70] sm:$0xf]
    %v1804 = vld [vmem:[%s7 + $0x74] sm:$0xf]
    %v1805 = vld [vmem:[%s7 + $0x78] sm:$0xf]
    %v1806 = vld [vmem:[%s7 + $0x7c] sm:$0xf]
    %v1807 = vld [vmem:[%s7 + $0x80] sm:$0xf]
    %v1808 = vld [vmem:[%s7 + $0x84] sm:$0xf]
    %v1809 = vld [vmem:[%s7 + $0x88] sm:$0xf]
    %v1810 = vld [vmem:[%s7 + $0x8c] sm:$0xf]
    %v1811 = vld [vmem:[%s7 + $0x90] sm:$0xf]
    %v1812 = vld [vmem:[%s7 + $0x94] sm:$0xf]
    %v1813 = vld [vmem:[%s7 + $0x98] sm:$0xf]
    %v1814 = vld [vmem:[%s7 + $0x9c] sm:$0xf]
    %v1815 = vld [vmem:[%s7 + $0xa0] sm:$0xf]
    %v1816 = vld [vmem:[%s7 + $0xa4] sm:$0xf]
    %v1817 = vld [vmem:[%s7 + $0xa8] sm:$0xf]
    %v1818 = vld [vmem:[%s7 + $0xac] sm:$0xf]
    %v1819 = vld [vmem:[%s7 + $0xb0] sm:$0xf]
    %v1820 = vld [vmem:[%s7 + $0xb4] sm:$0xf]
    %v1821 = vld [vmem:[%s7 + $0xb8] sm:$0xf]
    %v1822 = vld [vmem:[%s7 + $0xbc] sm:$0xf]
    %v1823 = vld [vmem:[%s7 + $0xc0] sm:$0xf]
    %v1824 = vld [vmem:[%s7 + $0xc4] sm:$0xf]
    %v1825 = vld [vmem:[%s7 + $0xc8] sm:$0xf]
    %v1826 = vld [vmem:[%s7 + $0xcc] sm:$0xf]
    %v1827 = vld [vmem:[%s7 + $0xd0] sm:$0xf]
    %v1828 = vld [vmem:[%s7 + $0xd4] sm:$0xf]
    %v1829 = vld [vmem:[%s7 + $0xd8] sm:$0xf]
    %v1830 = vld [vmem:[%s7 + $0xdc] sm:$0xf]
    %v1831 = vld [vmem:[%s7 + $0xe0] sm:$0xf]
    %v1832 = vld [vmem:[%s7 + $0xe4] sm:$0xf]
    %v1833 = vld [vmem:[%s7 + $0xe8] sm:$0xf]
    %v1834 = vld [vmem:[%s7 + $0xec] sm:$0xf]
    %v1835 = vld [vmem:[%s7 + $0xf0] sm:$0xf]
    %v1836 = vld [vmem:[%s7 + $0xf4] sm:$0xf]
    %v1837 = vld [vmem:[%s7 + $0xf8] sm:$0xf]
    %v1838 = vld [vmem:[%s7 + $0xfc] sm:$0xf]
    %v1839 = vld [vmem:[%s7 + $0x100] sm:$0xf]
    %v1840 = vld [vmem:[%s7 + $0x104] sm:$0xf]
    %v1841 = vld [vmem:[%s7 + $0x108] sm:$0xf]
    %v1842 = vld [vmem:[%s7 + $0x10c] sm:$0xf]
    %v1843 = vld [vmem:[%s7 + $0x110] sm:$0xf]
    %v1844 = vld [vmem:[%s7 + $0x114] sm:$0xf]
    %v1845 = vld [vmem:[%s7 + $0x118] sm:$0xf]
    %v1846 = vld [vmem:[%s7 + $0x11c] sm:$0xf]
    %v1847 = vld [vmem:[%s7 + $0x120] sm:$0xf]
    %v1848 = vld [vmem:[%s7 + $0x124] sm:$0xf]
    %v1849 = vld [vmem:[%s7 + $0x128] sm:$0xf]
    %v1850 = vld [vmem:[%s7 + $0x12c] sm:$0xf]
    %v1851 = vld [vmem:[%s7 + $0x130] sm:$0xf]
    %v1852 = vld [vmem:[%s7 + $0x134] sm:$0xf]
    %v1853 = vld [vmem:[%s7 + $0x138] sm:$0xf]
    %v1854 = vld [vmem:[%s7 + $0x13c] sm:$0xf]
    %v1855 = vld [vmem:[%s7 + $0x140] sm:$0xf]
    %v1856 = vld [vmem:[%s7 + $0x144] sm:$0xf]
    %v1857 = vld [vmem:[%s7 + $0x148] sm:$0xf]
    %v1858 = vld [vmem:[%s7 + $0x14c] sm:$0xf]
    %v1859 = vld [vmem:[%s7 + $0x150] sm:$0xf]
    %v1860 = vld [vmem:[%s7 + $0x154] sm:$0xf]
    %v1861 = vld [vmem:[%s7 + $0x158] sm:$0xf]
    %v1862 = vld [vmem:[%s7 + $0x15c] sm:$0xf]
    %v1863 = vld [vmem:[%s7 + $0x160] sm:$0xf]
    %v1864 = vld [vmem:[%s7 + $0x164] sm:$0xf]
    %v1865 = vld [vmem:[%s7 + $0x168] sm:$0xf]
    %v1866 = vld [vmem:[%s7 + $0x16c] sm:$0xf]
    %v1867 = vld [vmem:[%s7 + $0x170] sm:$0xf]
    %v1868 = vld [vmem:[%s7 + $0x174] sm:$0xf]
    %v1869 = vld [vmem:[%s7 + $0x178] sm:$0xf]
    %v1870 = vld [vmem:[%s7 + $0x17c] sm:$0xf]
    %v1871 = vld [vmem:[%s7 + $0x180] sm:$0xf]
    %v1872 = vld [vmem:[%s7 + $0x184] sm:$0xf]
    %v1873 = vld [vmem:[%s7 + $0x188] sm:$0xf]
    %v1874 = vld [vmem:[%s7 + $0x18c] sm:$0xf]
    %v1875 = vld [vmem:[%s7 + $0x190] sm:$0xf]
    %v1876 = vld [vmem:[%s7 + $0x194] sm:$0xf]
    %v1877 = vld [vmem:[%s7 + $0x198] sm:$0xf]
    %v1878 = vld [vmem:[%s7 + $0x19c] sm:$0xf]
    %v1879 = vld [vmem:[%s7 + $0x1a0] sm:$0xf]
    %v1880 = vld [vmem:[%s7 + $0x1a4] sm:$0xf]
    %v1881 = vld [vmem:[%s7 + $0x1a8] sm:$0xf]
    %v1882 = vld [vmem:[%s7 + $0x1ac] sm:$0xf]
    %v1883 = vld [vmem:[%s7 + $0x1b0] sm:$0xf]
    %v1884 = vld [vmem:[%s7 + $0x1b4] sm:$0xf]
    %v1885 = vld [vmem:[%s7 + $0x1b8] sm:$0xf]
    %v1886 = vld [vmem:[%s7 + $0x1bc] sm:$0xf]
    %v1887 = vld [vmem:[%s7 + $0x1c0] sm:$0xf]
    %v1888 = vld [vmem:[%s7 + $0x1c4] sm:$0xf]
    %v1889 = vld [vmem:[%s7 + $0x1c8] sm:$0xf]
    %v1890 = vld [vmem:[%s7 + $0x1cc] sm:$0xf]
    %v1891 = vld [vmem:[%s7 + $0x1d0] sm:$0xf]
    %v1892 = vld [vmem:[%s7 + $0x1d4] sm:$0xf]
    %v1893 = vld [vmem:[%s7 + $0x1d8] sm:$0xf]
    %v1894 = vld [vmem:[%s7 + $0x1dc] sm:$0xf]
    %v1895 = vld [vmem:[%s7 + $0x1e0] sm:$0xf]
    %v1896 = vld [vmem:[%s7 + $0x1e4] sm:$0xf]
    %v1897 = vld [vmem:[%s7 + $0x1e8] sm:$0xf]
    %v1898 = vld [vmem:[%s7 + $0x1ec] sm:$0xf]
    %v1899 = vld [vmem:[%s7 + $0x1f0] sm:$0xf]
    %v1900 = vld [vmem:[%s7 + $0x1f4] sm:$0xf]
    %v1901 = vld [vmem:[%s7 + $0x1f8] sm:$0xf]
    %v1902 = vld [vmem:[%s7 + $0x1fc] sm:$0xf]
    %v1903 = vld [vmem:[%s8] sm:$0x1]
    %v1905 = vlaneseq
    %v1906 = vshrl.u32 %v1905, 7
    %v1907 = vsub.s32 0, %v1906
    %v1908 = vrot.slane %v1903, %v1907
    %v2038 = vunpack.c.l.b16 %v1775
    %v2039 = vunpack.c.l.b16 %v1776
    %v2040 = vunpack.c.l.b16 %v1777
    %v2041 = vunpack.c.l.b16 %v1778
    %v2042 = vunpack.c.l.b16 %v1779
    %v2043 = vunpack.c.l.b16 %v1780
    %v2044 = vunpack.c.l.b16 %v1781
    %v2045 = vunpack.c.l.b16 %v1782
    %v2046 = vunpack.c.l.b16 %v1783
    %v2047 = vunpack.c.l.b16 %v1784
    %v2048 = vunpack.c.l.b16 %v1785
    %v2049 = vunpack.c.l.b16 %v1786
    %v2050 = vunpack.c.l.b16 %v1787
    %v2051 = vunpack.c.l.b16 %v1788
    %v2052 = vunpack.c.l.b16 %v1789
    %v2053 = vunpack.c.l.b16 %v1790
    %v2054 = vunpack.c.l.b16 %v1791
    %v2055 = vunpack.c.l.b16 %v1792
    %v2056 = vunpack.c.l.b16 %v1793
    %v2057 = vunpack.c.l.b16 %v1794
    %v2058 = vunpack.c.l.b16 %v1795
    %v2059 = vunpack.c.l.b16 %v1796
    %v2060 = vunpack.c.l.b16 %v1797
    %v2061 = vunpack.c.l.b16 %v1798
    %v2062 = vunpack.c.l.b16 %v1799
    %v2063 = vunpack.c.l.b16 %v1800
    %v2064 = vunpack.c.l.b16 %v1801
    %v2065 = vunpack.c.l.b16 %v1802
    %v2066 = vunpack.c.l.b16 %v1803
    %v2067 = vunpack.c.l.b16 %v1804
    %v2068 = vunpack.c.l.b16 %v1805
    %v2069 = vunpack.c.l.b16 %v1806
    %v2070 = vunpack.c.l.b16 %v1807
    %v2071 = vunpack.c.l.b16 %v1808
    %v2072 = vunpack.c.l.b16 %v1809
    %v2073 = vunpack.c.l.b16 %v1810
    %v2074 = vunpack.c.l.b16 %v1811
    %v2075 = vunpack.c.l.b16 %v1812
    %v2076 = vunpack.c.l.b16 %v1813
    %v2077 = vunpack.c.l.b16 %v1814
    %v2078 = vunpack.c.l.b16 %v1815
    %v2079 = vunpack.c.l.b16 %v1816
    %v2080 = vunpack.c.l.b16 %v1817
    %v2081 = vunpack.c.l.b16 %v1818
    %v2082 = vunpack.c.l.b16 %v1819
    %v2083 = vunpack.c.l.b16 %v1820
    %v2084 = vunpack.c.l.b16 %v1821
    %v2085 = vunpack.c.l.b16 %v1822
    %v2086 = vunpack.c.l.b16 %v1823
    %v2087 = vunpack.c.l.b16 %v1824
    %v2088 = vunpack.c.l.b16 %v1825
    %v2089 = vunpack.c.l.b16 %v1826
    %v2090 = vunpack.c.l.b16 %v1827
    %v2091 = vunpack.c.l.b16 %v1828
    %v2092 = vunpack.c.l.b16 %v1829
    %v2093 = vunpack.c.l.b16 %v1830
    %v2094 = vunpack.c.l.b16 %v1831
    %v2095 = vunpack.c.l.b16 %v1832
    %v2096 = vunpack.c.l.b16 %v1833
    %v2097 = vunpack.c.l.b16 %v1834
    %v2098 = vunpack.c.l.b16 %v1835
    %v2099 = vunpack.c.l.b16 %v1836
    %v2100 = vunpack.c.l.b16 %v1837
    %v2101 = vunpack.c.l.b16 %v1838
    %v2102 = vunpack.c.l.b16 %v1839
    %v2103 = vunpack.c.l.b16 %v1840
    %v2104 = vunpack.c.l.b16 %v1841
    %v2105 = vunpack.c.l.b16 %v1842
    %v2106 = vunpack.c.l.b16 %v1843
    %v2107 = vunpack.c.l.b16 %v1844
    %v2108 = vunpack.c.l.b16 %v1845
    %v2109 = vunpack.c.l.b16 %v1846
    %v2110 = vunpack.c.l.b16 %v1847
    %v2111 = vunpack.c.l.b16 %v1848
    %v2112 = vunpack.c.l.b16 %v1849
    %v2113 = vunpack.c.l.b16 %v1850
    %v2114 = vunpack.c.l.b16 %v1851
    %v2115 = vunpack.c.l.b16 %v1852
    %v2116 = vunpack.c.l.b16 %v1853
    %v2117 = vunpack.c.l.b16 %v1854
    %v2118 = vunpack.c.l.b16 %v1855
    %v2119 = vunpack.c.l.b16 %v1856
    %v2120 = vunpack.c.l.b16 %v1857
    %v2121 = vunpack.c.l.b16 %v1858
    %v2122 = vunpack.c.l.b16 %v1859
    %v2123 = vunpack.c.l.b16 %v1860
    %v2124 = vunpack.c.l.b16 %v1861
    %v2125 = vunpack.c.l.b16 %v1862
    %v2126 = vunpack.c.l.b16 %v1863
    %v2127 = vunpack.c.l.b16 %v1864
    %v2128 = vunpack.c.l.b16 %v1865
    %v2129 = vunpack.c.l.b16 %v1866
    %v2130 = vunpack.c.l.b16 %v1867
    %v2131 = vunpack.c.l.b16 %v1868
    %v2132 = vunpack.c.l.b16 %v1869
    %v2133 = vunpack.c.l.b16 %v1870
    %v2134 = vunpack.c.l.b16 %v1871
    %v2135 = vunpack.c.l.b16 %v1872
    %v2136 = vunpack.c.l.b16 %v1873
    %v2137 = vunpack.c.l.b16 %v1874
    %v2138 = vunpack.c.l.b16 %v1875
    %v2139 = vunpack.c.l.b16 %v1876
    %v2140 = vunpack.c.l.b16 %v1877
    %v2141 = vunpack.c.l.b16 %v1878
    %v2142 = vunpack.c.l.b16 %v1879
    %v2143 = vunpack.c.l.b16 %v1880
    %v2144 = vunpack.c.l.b16 %v1881
    %v2145 = vunpack.c.l.b16 %v1882
    %v2146 = vunpack.c.l.b16 %v1883
    %v2147 = vunpack.c.l.b16 %v1884
    %v2148 = vunpack.c.l.b16 %v1885
    %v2149 = vunpack.c.l.b16 %v1886
    %v2150 = vunpack.c.l.b16 %v1887
    %v2151 = vunpack.c.l.b16 %v1888
    %v2152 = vunpack.c.l.b16 %v1889
    %v2153 = vunpack.c.l.b16 %v1890
    %v2154 = vunpack.c.l.b16 %v1891
    %v2155 = vunpack.c.l.b16 %v1892
    %v2156 = vunpack.c.l.b16 %v1893
    %v2157 = vunpack.c.l.b16 %v1894
    %v2158 = vunpack.c.l.b16 %v1895
    %v2159 = vunpack.c.l.b16 %v1896
    %v2160 = vunpack.c.l.b16 %v1897
    %v2161 = vunpack.c.l.b16 %v1898
    %v2162 = vunpack.c.l.b16 %v1899
    %v2163 = vunpack.c.l.b16 %v1900
    %v2164 = vunpack.c.l.b16 %v1901
    %v2165 = vunpack.c.l.b16 %v1902
    %v2166 = vpack.c.b16 %v2039, %v2038
    %v2167 = vpack.c.b16 %v2041, %v2040
    %v2168 = vpack.c.b16 %v2043, %v2042
    %v2169 = vpack.c.b16 %v2045, %v2044
    %v2170 = vpack.c.b16 %v2047, %v2046
    %v2171 = vpack.c.b16 %v2049, %v2048
    %v2172 = vpack.c.b16 %v2051, %v2050
    %v2173 = vpack.c.b16 %v2053, %v2052
    %v2174 = vpack.c.b16 %v2055, %v2054
    %v2175 = vpack.c.b16 %v2057, %v2056
    %v2176 = vpack.c.b16 %v2059, %v2058
    %v2177 = vpack.c.b16 %v2061, %v2060
    %v2178 = vpack.c.b16 %v2063, %v2062
    %v2179 = vpack.c.b16 %v2065, %v2064
    %v2180 = vpack.c.b16 %v2067, %v2066
    %v2181 = vpack.c.b16 %v2069, %v2068
    %v2182 = vpack.c.b16 %v2071, %v2070
    %v2183 = vpack.c.b16 %v2073, %v2072
    %v2184 = vpack.c.b16 %v2075, %v2074
    %v2185 = vpack.c.b16 %v2077, %v2076
    %v2186 = vpack.c.b16 %v2079, %v2078
    %v2187 = vpack.c.b16 %v2081, %v2080
    %v2188 = vpack.c.b16 %v2083, %v2082
    %v2189 = vpack.c.b16 %v2085, %v2084
    %v2190 = vpack.c.b16 %v2087, %v2086
    %v2191 = vpack.c.b16 %v2089, %v2088
    %v2192 = vpack.c.b16 %v2091, %v2090
    %v2193 = vpack.c.b16 %v2093, %v2092
    %v2194 = vpack.c.b16 %v2095, %v2094
    %v2195 = vpack.c.b16 %v2097, %v2096
    %v2196 = vpack.c.b16 %v2099, %v2098
    %v2197 = vpack.c.b16 %v2101, %v2100
    %v2198 = vpack.c.b16 %v2103, %v2102
    %v2199 = vpack.c.b16 %v2105, %v2104
    %v2200 = vpack.c.b16 %v2107, %v2106
    %v2201 = vpack.c.b16 %v2109, %v2108
    %v2202 = vpack.c.b16 %v2111, %v2110
    %v2203 = vpack.c.b16 %v2113, %v2112
    %v2204 = vpack.c.b16 %v2115, %v2114
    %v2205 = vpack.c.b16 %v2117, %v2116
    %v2206 = vpack.c.b16 %v2119, %v2118
    %v2207 = vpack.c.b16 %v2121, %v2120
    %v2208 = vpack.c.b16 %v2123, %v2122
    %v2209 = vpack.c.b16 %v2125, %v2124
    %v2210 = vpack.c.b16 %v2127, %v2126
    %v2211 = vpack.c.b16 %v2129, %v2128
    %v2212 = vpack.c.b16 %v2131, %v2130
    %v2213 = vpack.c.b16 %v2133, %v2132
    %v2214 = vpack.c.b16 %v2135, %v2134
    %v2215 = vpack.c.b16 %v2137, %v2136
    %v2216 = vpack.c.b16 %v2139, %v2138
    %v2217 = vpack.c.b16 %v2141, %v2140
    %v2218 = vpack.c.b16 %v2143, %v2142
    %v2219 = vpack.c.b16 %v2145, %v2144
    %v2220 = vpack.c.b16 %v2147, %v2146
    %v2221 = vpack.c.b16 %v2149, %v2148
    %v2222 = vpack.c.b16 %v2151, %v2150
    %v2223 = vpack.c.b16 %v2153, %v2152
    %v2224 = vpack.c.b16 %v2155, %v2154
    %v2225 = vpack.c.b16 %v2157, %v2156
    %v2226 = vpack.c.b16 %v2159, %v2158
    %v2227 = vpack.c.b16 %v2161, %v2160
    %v2228 = vpack.c.b16 %v2163, %v2162
    %v2229 = vpack.c.b16 %v2165, %v2164
    %2294 = vmatprep.subr.bf16.mxu0 0
    %2295 = vmatpush1.bf16.msra.mxu0 %v2166
    %2296 = vmatprep.subr.bf16.mxu0 0
    %2297 = vmatpush1.bf16.msra.mxu0 %v2167
    %2298 = vmatprep.subr.bf16.mxu0 0
    %2299 = vmatpush1.bf16.msra.mxu0 %v2168
    %2300 = vmatprep.subr.bf16.mxu0 0
    %2301 = vmatpush1.bf16.msra.mxu0 %v2169
    %2302 = vmatprep.subr.bf16.mxu0 0
    %2303 = vmatpush1.bf16.msra.mxu0 %v2170
    %2304 = vmatprep.subr.bf16.mxu0 0
    %2305 = vmatpush1.bf16.msra.mxu0 %v2171
    %2306 = vmatprep.subr.bf16.mxu0 0
    %2307 = vmatpush1.bf16.msra.mxu0 %v2172
    %2308 = vmatprep.subr.bf16.mxu0 0
    %2309 = vmatpush1.bf16.msra.mxu0 %v2173
    %2310 = vmatprep.subr.bf16.mxu0 0
    %2311 = vmatpush1.bf16.msra.mxu0 %v2174
    %2312 = vmatprep.subr.bf16.mxu0 0
    %2313 = vmatpush1.bf16.msra.mxu0 %v2175
    %2314 = vmatprep.subr.bf16.mxu0 0
    %2315 = vmatpush1.bf16.msra.mxu0 %v2176
    %2316 = vmatprep.subr.bf16.mxu0 0
    %2317 = vmatpush1.bf16.msra.mxu0 %v2177
    %2318 = vmatprep.subr.bf16.mxu0 0
    %2319 = vmatpush1.bf16.msra.mxu0 %v2178
    %2320 = vmatprep.subr.bf16.mxu0 0
    %2321 = vmatpush1.bf16.msra.mxu0 %v2179
    %2322 = vmatprep.subr.bf16.mxu0 0
    %2323 = vmatpush1.bf16.msra.mxu0 %v2180
    %2324 = vmatprep.subr.bf16.mxu0 0
    %2325 = vmatpush1.bf16.msra.mxu0 %v2181
    %2326 = vmatprep.mubr.bf16.mxu0 %v1768
    %2327 = vmatmul.mubr.bf16.gmra.mrb[0].mxu0 %v1767
    %v2328 = vpop.f32.mrb[0].mxu0
    %v2329 = vadd.f32 %v1908, %v2328
    %v2330 = vpop.f32.mrb[0].mxu0
    %v2331 = vpop.f32.mrb[0].mxu0
    %v2332 = vadd.f32 %v1908, %v2331
    %v2333 = vpop.f32.mrb[0].mxu0
    %2334 = vdwg.mxu0
    %2335 = vmatprep.subr.bf16.mxu0 0
    %2336 = vmatpush1.bf16.msra.mxu0 %v2182
    %2337 = vmatprep.subr.bf16.mxu0 0
    %2338 = vmatpush1.bf16.msra.mxu0 %v2183
    %2339 = vmatprep.subr.bf16.mxu0 0
    %2340 = vmatpush1.bf16.msra.mxu0 %v2184
    %2341 = vmatprep.subr.bf16.mxu0 0
    %2342 = vmatpush1.bf16.msra.mxu0 %v2185
    %2343 = vmatprep.subr.bf16.mxu0 0
    %2344 = vmatpush1.bf16.msra.mxu0 %v2186
    %2345 = vmatprep.subr.bf16.mxu0 0
    %2346 = vmatpush1.bf16.msra.mxu0 %v2187
    %2347 = vmatprep.subr.bf16.mxu0 0
    %2348 = vmatpush1.bf16.msra.mxu0 %v2188
    %2349 = vmatprep.subr.bf16.mxu0 0
    %2350 = vmatpush1.bf16.msra.mxu0 %v2189
    %2351 = vmatprep.subr.bf16.mxu0 0
    %2352 = vmatpush1.bf16.msra.mxu0 %v2190
    %2353 = vmatprep.subr.bf16.mxu0 0
    %2354 = vmatpush1.bf16.msra.mxu0 %v2191
    %2355 = vmatprep.subr.bf16.mxu0 0
    %2356 = vmatpush1.bf16.msra.mxu0 %v2192
    %2357 = vmatprep.subr.bf16.mxu0 0
    %2358 = vmatpush1.bf16.msra.mxu0 %v2193
    %2359 = vmatprep.subr.bf16.mxu0 0
    %2360 = vmatpush1.bf16.msra.mxu0 %v2194
    %2361 = vmatprep.subr.bf16.mxu0 0
    %2362 = vmatpush1.bf16.msra.mxu0 %v2195
    %2363 = vmatprep.subr.bf16.mxu0 0
    %2364 = vmatpush1.bf16.msra.mxu0 %v2196
    %2365 = vmatprep.subr.bf16.mxu0 0
    %2366 = vmatpush1.bf16.msra.mxu0 %v2197
    %2367 = vmatprep.mubr.bf16.mxu0 %v1770
    %2368 = vmatmul.mubr.bf16.gmra.mrb[0].mxu0 %v1769
    %v2369 = vpop.f32.mrb[0].mxu0
    %v2370 = vadd.f32 %v2329, %v2369
    %v2371 = vpop.f32.mrb[0].mxu0
    %v2372 = vpop.f32.mrb[0].mxu0
    %v2373 = vadd.f32 %v2332, %v2372
    %v2374 = vpop.f32.mrb[0].mxu0
    %2375 = vdwg.mxu0
    %2376 = vmatprep.subr.bf16.mxu0 0
    %2377 = vmatpush1.bf16.msra.mxu0 %v2198
    %2378 = vmatprep.subr.bf16.mxu0 0
    %2379 = vmatpush1.bf16.msra.mxu0 %v2199
    %2380 = vmatprep.subr.bf16.mxu0 0
    %2381 = vmatpush1.bf16.msra.mxu0 %v2200
    %2382 = vmatprep.subr.bf16.mxu0 0
    %2383 = vmatpush1.bf16.msra.mxu0 %v2201
    %2384 = vmatprep.subr.bf16.mxu0 0
    %2385 = vmatpush1.bf16.msra.mxu0 %v2202
    %2386 = vmatprep.subr.bf16.mxu0 0
    %2387 = vmatpush1.bf16.msra.mxu0 %v2203
    %2388 = vmatprep.subr.bf16.mxu0 0
    %2389 = vmatpush1.bf16.msra.mxu0 %v2204
    %2390 = vmatprep.subr.bf16.mxu0 0
    %2391 = vmatpush1.bf16.msra.mxu0 %v2205
    %2392 = vmatprep.subr.bf16.mxu0 0
    %2393 = vmatpush1.bf16.msra.mxu0 %v2206
    %2394 = vmatprep.subr.bf16.mxu0 0
    %2395 = vmatpush1.bf16.msra.mxu0 %v2207
    %2396 = vmatprep.subr.bf16.mxu0 0
    %2397 = vmatpush1.bf16.msra.mxu0 %v2208
    %2398 = vmatprep.subr.bf16.mxu0 0
    %2399 = vmatpush1.bf16.msra.mxu0 %v2209
    %2400 = vmatprep.subr.bf16.mxu0 0
    %2401 = vmatpush1.bf16.msra.mxu0 %v2210
    %2402 = vmatprep.subr.bf16.mxu0 0
    %2403 = vmatpush1.bf16.msra.mxu0 %v2211
    %2404 = vmatprep.subr.bf16.mxu0 0
    %2405 = vmatpush1.bf16.msra.mxu0 %v2212
    %2406 = vmatprep.subr.bf16.mxu0 0
    %2407 = vmatpush1.bf16.msra.mxu0 %v2213
    %2408 = vmatprep.mubr.bf16.mxu0 %v1772
    %2409 = vmatmul.mubr.bf16.gmra.mrb[0].mxu0 %v1771
    %v2410 = vpop.f32.mrb[0].mxu0
    %v2411 = vadd.f32 %v2370, %v2410
    %v2412 = vpop.f32.mrb[0].mxu0
    %v2413 = vpop.f32.mrb[0].mxu0
    %v2414 = vadd.f32 %v2373, %v2413
    %v2415 = vpop.f32.mrb[0].mxu0
    %2416 = vdwg.mxu0
    %2417 = vmatprep.subr.bf16.mxu0 0
    %2418 = vmatpush1.bf16.msra.mxu0 %v2214
    %2419 = vmatprep.subr.bf16.mxu0 0
    %2420 = vmatpush1.bf16.msra.mxu0 %v2215
    %2421 = vmatprep.subr.bf16.mxu0 0
    %2422 = vmatpush1.bf16.msra.mxu0 %v2216
    %2423 = vmatprep.subr.bf16.mxu0 0
    %2424 = vmatpush1.bf16.msra.mxu0 %v2217
    %2425 = vmatprep.subr.bf16.mxu0 0
    %2426 = vmatpush1.bf16.msra.mxu0 %v2218
    %2427 = vmatprep.subr.bf16.mxu0 0
    %2428 = vmatpush1.bf16.msra.mxu0 %v2219
    %2429 = vmatprep.subr.bf16.mxu0 0
    %2430 = vmatpush1.bf16.msra.mxu0 %v2220
    %2431 = vmatprep.subr.bf16.mxu0 0
    %2432 = vmatpush1.bf16.msra.mxu0 %v2221
    %2433 = vmatprep.subr.bf16.mxu0 0
    %2434 = vmatpush1.bf16.msra.mxu0 %v2222
    %2435 = vmatprep.subr.bf16.mxu0 0
    %2436 = vmatpush1.bf16.msra.mxu0 %v2223
    %2437 = vmatprep.subr.bf16.mxu0 0
    %2438 = vmatpush1.bf16.msra.mxu0 %v2224
    %2439 = vmatprep.subr.bf16.mxu0 0
    %2440 = vmatpush1.bf16.msra.mxu0 %v2225
    %2441 = vmatprep.subr.bf16.mxu0 0
    %2442 = vmatpush1.bf16.msra.mxu0 %v2226
    %2443 = vmatprep.subr.bf16.mxu0 0
    %2444 = vmatpush1.bf16.msra.mxu0 %v2227
    %2445 = vmatprep.subr.bf16.mxu0 0
    %2446 = vmatpush1.bf16.msra.mxu0 %v2228
    %2447 = vmatprep.subr.bf16.mxu0 0
    %2448 = vmatpush1.bf16.msra.mxu0 %v2229
    %2449 = vmatprep.mubr.bf16.mxu0 %v1774
    %2450 = vmatmul.mubr.bf16.gmra.mrb[0].mxu0 %v1773
    %v2451 = vpop.f32.mrb[0].mxu0
    %v2452 = vadd.f32 %v2411, %v2451
    %v2453 = vpop.f32.mrb[0].mxu0
    %v2454 = vpop.f32.mrb[0].mxu0
    %v2455 = vadd.f32 %v2414, %v2454
    %v2456 = vpop.f32.mrb[0].mxu0
    %2457 = vdwg.mxu0
    %v2458 = vadd.f32 %v1435, %v2452
    %v2459 = vadd.f32 %v1436, %v2455
    %2460 = vst.msk [vmem:[#allocation2] sm:$0xff] %vm38, %v2458
    %2461 = vst.msk [vmem:[#allocation2 + $0x8] sm:$0xff] %vm38, %v2459
    // Predicated region
    $region38: #{tpu_custom_call.1} parent=1 // pred_check
      _
    $region39: #{tpu_custom_call.1} parent=1 // pred_check_branch
      %2463 = sbr.rel (0) target = $region41
    $region40: #{tpu_custom_call.1} parent=1 // pred_region
      %s2465 = ssub.s32 256, 256
      %2466 = vsyncadd [#allocation3], %s2465
      %s2467 = sshll.u32 [#allocation2], 4
      %s2468 = int_to_ptr.vmem [resolvable:$true] %s2467
      %2473 = dma.vmem_to_hbm [thread:$0]  %s2468, 256, %s9, [#allocation3], 128, 128, 8
    $region41: #{tpu_custom_call.1} parent=1 // pred_fallthru
      _
    // Predicated region
    $region42: #{tpu_custom_call.1} parent=1 // pred_check
      _
    $region43: #{tpu_custom_call.1} parent=1 // pred_check_branch
      %2475 = sbr.rel (0) target = $region45
    $region44: #{tpu_custom_call.1} parent=1 // pred_region
      %2476 = dma.done [#allocation3], 256
    $region45: #{tpu_custom_call.1} parent=1 // pred_fallthru
      _
    %2477 = vsyncpa [#allocation3], 1

</llo_original>
